<compile_context>
chip_gen: v6e
topology: v6e:2x2x1
jax: 0.10.0
libtpu: 0.0.40
codegen_flags: <defaults>
</compile_context>

<pallas_src>
import functools

import jax
import jax.numpy as jnp
from jax import lax
from jax.experimental import pallas as pl
from jax.experimental.pallas import tpu as pltpu


def _scsa_kernel(x_ref, row_ref, col_ref, w1_ref, w2_ref, ws3_ref, ws1_ref,
                 wa_ref, o_ref, *, H, W):
    Nb, C, HW = x_ref.shape
    Co = w1_ref.shape[0]
    F = o_ref.shape[1]

    x = x_ref[...].astype(jnp.float32)      # (Nb, C, HW), lane-dense
    row = row_ref[...]                      # (1, 1, HW) int32: h index of each flat pos
    col = col_ref[...]                      # (1, 1, HW) int32: w index of each flat pos

    # ---- channel_wise: GAP -> 1x1 conv -> ReLU -> 1x1 conv -> sigmoid -------------
    # One slab-wide lane reduce, then tiny per-image MACs with scalar SMEM weights.
    pooled = jnp.mean(x, axis=-1, keepdims=True)            # (Nb, C, 1)
    pooled_c = [pooled[:, c:c + 1, :] for c in range(C)]    # C x (Nb, 1, 1)

    h1 = []
    for o in range(Co):
        acc = w1_ref[o, 0] * pooled_c[0]
        for c in range(1, C):
            acc = acc + w1_ref[o, c] * pooled_c[c]
        h1.append(jnp.maximum(acc, 0.0))                    # (Nb, 1, 1)

    s_c = []
    for c in range(C):
        acc = w2_ref[c, 0] * h1[0]
        for o in range(1, Co):
            acc = acc + w2_ref[c, o] * h1[o]
        s_c.append(jax.nn.sigmoid(acc))                     # (Nb, 1, 1)

    # ---- channel mean of global_x = x + s (decomposed, avoids materializing g) ----
    s_mean = s_c[0]
    for c in range(1, C):
        s_mean = s_mean + s_c[c]
    s_mean = s_mean * (1.0 / C)                             # (Nb, 1, 1)
    m = jnp.mean(x, axis=1, keepdims=True) + s_mean         # (Nb, 1, HW)

    # ---- spatial_wise: 3x3 conv (pad=1) -> ReLU -> 1x1 conv -> sigmoid ------------
    # Shift taps with XLU lane rolls on the flat H*W axis; zero-padding is emulated
    # with the precomputed row/col boundary masks.
    acc = ws3_ref[1, 1] * m
    for di in (-1, 0, 1):
        for dj in (-1, 0, 1):
            if di == 0 and dj == 0:
                continue
            shift = di * W + dj                              # flat offset of this tap
            shifted = pltpu.roll(m, shift=(-shift) % HW, axis=2)
            cond = None
            if di == -1:
                cond = row >= 1
            elif di == 1:
                cond = row <= H - 2
            if dj == -1:
                c2 = col >= 1
                cond = c2 if cond is None else (cond & c2)
            elif dj == 1:
                c2 = col <= W - 2
                cond = c2 if cond is None else (cond & c2)
            acc = acc + ws3_ref[di + 1, dj + 1] * jnp.where(cond, shifted, 0.0)
    sp = jax.nn.sigmoid(ws1_ref[0, 0] * jnp.maximum(acc, 0.0))   # (Nb, 1, HW)

    # ---- attention_wise: 1x1 conv C -> F, sigmoid ---------------------------------
    # global_x[:, c] = x[:, c] + s_c + sp ; out[:, f] = sigmoid(sum_c wa[f,c]*g2_c)
    g2_c = [x[:, c:c + 1, :] + s_c[c] + sp for c in range(C)]    # C x (Nb, 1, HW)
    for f in range(F):
        acc = wa_ref[f, 0] * g2_c[0]
        for c in range(1, C):
            acc = acc + wa_ref[f, c] * g2_c[c]
        # Full-lane-width (256-lane) row store into the lane-dense output block.
        o_ref[:, f:f + 1, :] = jax.nn.sigmoid(acc).astype(o_ref.dtype)


def scale_channel_spatial_attention(x, w1, w2, ws3, ws1, wa, *, batch_block=None):
    """x: (N, C, H, W) f32.  Returns (N, num_features, H, W)."""
    N, C, H, W = x.shape
    F = wa.shape[0]
    HW = H * W

    if batch_block is None:
        # ~2 MiB of activations per grid step; double-buffered blocks stay well
        # under default scoped VMEM on v5e (16 MiB) / v6e (32 MiB) / v7x (32 MiB).
        per_image = (C + F) * HW * x.dtype.itemsize
        batch_block = max(1, min(N, (2 * 1024 * 1024) // max(per_image, 1)))
        while N % batch_block:
            batch_block -= 1
    nb = batch_block
    assert N % nb == 0

    # Lane-dense layout: H*W (>=128) on the lane axis; reshape is free in HBM.
    x_flat = x.reshape(N, C, HW)
    row_idx = (jnp.arange(HW, dtype=jnp.int32) // W).reshape(1, 1, HW)
    col_idx = (jnp.arange(HW, dtype=jnp.int32) % W).reshape(1, 1, HW)

    kernel = functools.partial(_scsa_kernel, H=H, W=W)
    smem = pl.BlockSpec(memory_space=pltpu.MemorySpace.SMEM)

    out_flat = pl.pallas_call(
        kernel,
        out_shape=jax.ShapeDtypeStruct((N, F, HW), x.dtype),
        grid=(N // nb,),
        in_specs=[
            pl.BlockSpec((nb, C, HW), lambda n: (n, 0, 0)),   # x block (lane-dense)
            pl.BlockSpec((1, 1, HW), lambda n: (0, 0, 0)),    # row indices
            pl.BlockSpec((1, 1, HW), lambda n: (0, 0, 0)),    # col indices
            smem, smem, smem, smem, smem,                     # w1, w2, ws3, ws1, wa
        ],
        out_specs=pl.BlockSpec((nb, F, HW), lambda n: (n, 0, 0)),
        compiler_params=pltpu.CompilerParams(
            dimension_semantics=("parallel",)),               # no cross-step carry
    )(x_flat, row_idx, col_idx, w1, w2, ws3, ws1, wa)
    return out_flat.reshape(N, F, H, W)


def _reference(x, w1, w2, ws3, ws1, wa):
    """Pure-JAX reference matching the PyTorch forward (exact f32 contractions)."""
    hp = lax.Precision.HIGHEST
    pooled = jnp.mean(x, axis=(2, 3), keepdims=True)                     # (N,C,1,1)
    h1 = jnp.maximum(jnp.einsum('oc,nchw->nohw', w1, pooled, precision=hp), 0.0)
    s = jax.nn.sigmoid(jnp.einsum('co,nohw->nchw', w2, h1, precision=hp))
    g = s + x
    m = jnp.mean(g, axis=1, keepdims=True)                               # (N,1,H,W)
    conv = lax.conv_general_dilated(
        m, ws3.reshape(1, 1, 3, 3), window_strides=(1, 1), padding='SAME',
        dimension_numbers=('NCHW', 'OIHW', 'NCHW'), precision=hp)
    sp = jax.nn.sigmoid(ws1[0, 0] * jnp.maximum(conv, 0.0))              # (N,1,H,W)
    g2 = sp + g
    return jax.nn.sigmoid(jnp.einsum('fc,nchw->nfhw', wa, g2, precision=hp))


if __name__ == "__main__":
    N, C, Co, F, H, W = 2, 4, 8, 6, 16, 16   # in_planes=4, out_planes=8, num_features=6

    key = jax.random.PRNGKey(0)
    kx, k1, k2, k3, k4, k5 = jax.random.split(key, 6)
    x = jax.random.normal(kx, (N, C, H, W), jnp.float32)

    # kaiming_normal_(mode='fan_out', nonlinearity='relu') -> std = sqrt(2 / fan_out)
    w1 = jax.random.normal(k1, (Co, C), jnp.float32) * (2.0 / Co) ** 0.5      # (out_planes, in_planes, 1, 1)
    w2 = jax.random.normal(k2, (C, Co), jnp.float32) * (2.0 / C) ** 0.5       # (in_planes, out_planes, 1, 1)
    ws3 = jax.random.normal(k3, (3, 3), jnp.float32) * (2.0 / 9.0) ** 0.5     # (1, 1, 3, 3)
    ws1 = jax.random.normal(k4, (1, 1), jnp.float32) * 2.0 ** 0.5             # (1, 1, 1, 1)
    wa = jax.random.normal(k5, (F, C), jnp.float32) * (2.0 / F) ** 0.5        # (num_features, in_planes, 1, 1)

    out = scale_channel_spatial_attention(x, w1, w2, ws3, ws1, wa)
    out = jax.block_until_ready(out)

    ref = _reference(x, w1, w2, ws3, ws1, wa)
    assert out.shape == (N, F, H, W), out.shape
    max_err = float(jnp.max(jnp.abs(out - ref)))
    assert jnp.allclose(out, ref, atol=1e-5, rtol=1e-5), max_err

    print("KERNEL_OK")
</pallas_src>

<mosaic_0001>
module attributes {stable_mosaic.version = 11 : i64} {
  func.func @_scsa_kernel(%arg0: i32, %arg1: memref<2x4x256xf32, #tpu.memory_space<vmem>>, %arg2: memref<1x1x256xi32, #tpu.memory_space<vmem>>, %arg3: memref<1x1x256xi32, #tpu.memory_space<vmem>>, %arg4: memref<8x4xf32, #tpu.memory_space<smem>>, %arg5: memref<4x8xf32, #tpu.memory_space<smem>>, %arg6: memref<3x3xf32, #tpu.memory_space<smem>>, %arg7: memref<1x1xf32, #tpu.memory_space<smem>>, %arg8: memref<6x4xf32, #tpu.memory_space<smem>>, %arg9: memref<2x6x256xf32, #tpu.memory_space<vmem>>) attributes {dimension_semantics = [#tpu.dimension_semantics<parallel>], iteration_bounds = array<i64: 1>, scalar_prefetch = 0 : i64, scratch_operands = 0 : i64, tpu.core_type = #tpu.core_type<tc>, window_params = [{transform_indices = @transform_0, window_bounds = array<i64: 2, 4, 256>}, {pipeline_mode = #tpu.pipeline_mode<synchronous>, transform_indices = @transform_1, window_bounds = array<i64: 1, 1, 256>}, {pipeline_mode = #tpu.pipeline_mode<synchronous>, transform_indices = @transform_2, window_bounds = array<i64: 1, 1, 256>}, {transform_indices = @transform_3, window_bounds = array<i64: 8, 4>}, {transform_indices = @transform_4, window_bounds = array<i64: 4, 8>}, {transform_indices = @transform_5, window_bounds = array<i64: 3, 3>}, {transform_indices = @transform_6, window_bounds = array<i64: 1, 1>}, {transform_indices = @transform_7, window_bounds = array<i64: 6, 4>}, {transform_indices = @transform_8, window_bounds = array<i64: 2, 6, 256>}]} {
    %c0 = arith.constant 0 : index
    %c0_0 = arith.constant 0 : index
    %c0_1 = arith.constant 0 : index
    %0 = vector.load %arg1[%c0, %c0_0, %c0_1] : memref<2x4x256xf32, #tpu.memory_space<vmem>>, vector<2x4x256xf32>
    %c0_2 = arith.constant 0 : index
    %c0_3 = arith.constant 0 : index
    %c0_4 = arith.constant 0 : index
    %1 = vector.load %arg2[%c0_2, %c0_3, %c0_4] : memref<1x1x256xi32, #tpu.memory_space<vmem>>, vector<1x1x256xi32>
    %c0_5 = arith.constant 0 : index
    %c0_6 = arith.constant 0 : index
    %c0_7 = arith.constant 0 : index
    %2 = vector.load %arg3[%c0_5, %c0_6, %c0_7] : memref<1x1x256xi32, #tpu.memory_space<vmem>>, vector<1x1x256xi32>
    %cst = arith.constant dense<0.000000e+00> : vector<2x4xf32>
    %3 = vector.multi_reduction <add>, %0, %cst [2] : vector<2x4x256xf32> to vector<2x4xf32>
    %4 = vector.shape_cast %3 : vector<2x4xf32> to vector<2x4x1xf32>
    %cst_8 = arith.constant 2.560000e+02 : f32
    %5 = vector.broadcast %cst_8 : f32 to vector<2x4x1xf32>
    %6 = arith.divf %4, %5 : vector<2x4x1xf32>
    %7 = vector.extract_strided_slice %6 {offsets = [0, 0, 0], sizes = [2, 1, 1], strides = [1, 1, 1]} : vector<2x4x1xf32> to vector<2x1x1xf32>
    %8 = vector.extract_strided_slice %6 {offsets = [0, 1, 0], sizes = [2, 1, 1], strides = [1, 1, 1]} : vector<2x4x1xf32> to vector<2x1x1xf32>
    %9 = vector.extract_strided_slice %6 {offsets = [0, 2, 0], sizes = [2, 1, 1], strides = [1, 1, 1]} : vector<2x4x1xf32> to vector<2x1x1xf32>
    %10 = vector.extract_strided_slice %6 {offsets = [0, 3, 0], sizes = [2, 1, 1], strides = [1, 1, 1]} : vector<2x4x1xf32> to vector<2x1x1xf32>
    %c0_9 = arith.constant 0 : index
    %c0_10 = arith.constant 0 : index
    %11 = memref.load %arg4[%c0_9, %c0_10] : memref<8x4xf32, #tpu.memory_space<smem>>
    %12 = vector.broadcast %11 : f32 to vector<2x1x1xf32>
    %13 = arith.mulf %12, %7 : vector<2x1x1xf32>
    %c0_11 = arith.constant 0 : index
    %c1 = arith.constant 1 : index
    %14 = memref.load %arg4[%c0_11, %c1] : memref<8x4xf32, #tpu.memory_space<smem>>
    %15 = vector.broadcast %14 : f32 to vector<2x1x1xf32>
    %16 = arith.mulf %15, %8 : vector<2x1x1xf32>
    %17 = arith.addf %13, %16 : vector<2x1x1xf32>
    %c0_12 = arith.constant 0 : index
    %c2 = arith.constant 2 : index
    %18 = memref.load %arg4[%c0_12, %c2] : memref<8x4xf32, #tpu.memory_space<smem>>
    %19 = vector.broadcast %18 : f32 to vector<2x1x1xf32>
    %20 = arith.mulf %19, %9 : vector<2x1x1xf32>
    %21 = arith.addf %17, %20 : vector<2x1x1xf32>
    %c0_13 = arith.constant 0 : index
    %c3 = arith.constant 3 : index
    %22 = memref.load %arg4[%c0_13, %c3] : memref<8x4xf32, #tpu.memory_space<smem>>
    %23 = vector.broadcast %22 : f32 to vector<2x1x1xf32>
    %24 = arith.mulf %23, %10 : vector<2x1x1xf32>
    %25 = arith.addf %21, %24 : vector<2x1x1xf32>
    %cst_14 = arith.constant 0.000000e+00 : f32
    %26 = vector.broadcast %cst_14 : f32 to vector<2x1x1xf32>
    %27 = arith.maximumf %25, %26 : vector<2x1x1xf32>
    %c1_15 = arith.constant 1 : index
    %c0_16 = arith.constant 0 : index
    %28 = memref.load %arg4[%c1_15, %c0_16] : memref<8x4xf32, #tpu.memory_space<smem>>
    %29 = vector.broadcast %28 : f32 to vector<2x1x1xf32>
    %30 = arith.mulf %29, %7 : vector<2x1x1xf32>
    %c1_17 = arith.constant 1 : index
    %c1_18 = arith.constant 1 : index
    %31 = memref.load %arg4[%c1_17, %c1_18] : memref<8x4xf32, #tpu.memory_space<smem>>
    %32 = vector.broadcast %31 : f32 to vector<2x1x1xf32>
    %33 = arith.mulf %32, %8 : vector<2x1x1xf32>
    %34 = arith.addf %30, %33 : vector<2x1x1xf32>
    %c1_19 = arith.constant 1 : index
    %c2_20 = arith.constant 2 : index
    %35 = memref.load %arg4[%c1_19, %c2_20] : memref<8x4xf32, #tpu.memory_space<smem>>
    %36 = vector.broadcast %35 : f32 to vector<2x1x1xf32>
    %37 = arith.mulf %36, %9 : vector<2x1x1xf32>
    %38 = arith.addf %34, %37 : vector<2x1x1xf32>
    %c1_21 = arith.constant 1 : index
    %c3_22 = arith.constant 3 : index
    %39 = memref.load %arg4[%c1_21, %c3_22] : memref<8x4xf32, #tpu.memory_space<smem>>
    %40 = vector.broadcast %39 : f32 to vector<2x1x1xf32>
    %41 = arith.mulf %40, %10 : vector<2x1x1xf32>
    %42 = arith.addf %38, %41 : vector<2x1x1xf32>
    %cst_23 = arith.constant 0.000000e+00 : f32
    %43 = vector.broadcast %cst_23 : f32 to vector<2x1x1xf32>
    %44 = arith.maximumf %42, %43 : vector<2x1x1xf32>
    %c2_24 = arith.constant 2 : index
    %c0_25 = arith.constant 0 : index
    %45 = memref.load %arg4[%c2_24, %c0_25] : memref<8x4xf32, #tpu.memory_space<smem>>
    %46 = vector.broadcast %45 : f32 to vector<2x1x1xf32>
    %47 = arith.mulf %46, %7 : vector<2x1x1xf32>
    %c2_26 = arith.constant 2 : index
    %c1_27 = arith.constant 1 : index
    %48 = memref.load %arg4[%c2_26, %c1_27] : memref<8x4xf32, #tpu.memory_space<smem>>
    %49 = vector.broadcast %48 : f32 to vector<2x1x1xf32>
    %50 = arith.mulf %49, %8 : vector<2x1x1xf32>
    %51 = arith.addf %47, %50 : vector<2x1x1xf32>
    %c2_28 = arith.constant 2 : index
    %c2_29 = arith.constant 2 : index
    %52 = memref.load %arg4[%c2_28, %c2_29] : memref<8x4xf32, #tpu.memory_space<smem>>
    %53 = vector.broadcast %52 : f32 to vector<2x1x1xf32>
    %54 = arith.mulf %53, %9 : vector<2x1x1xf32>
    %55 = arith.addf %51, %54 : vector<2x1x1xf32>
    %c2_30 = arith.constant 2 : index
    %c3_31 = arith.constant 3 : index
    %56 = memref.load %arg4[%c2_30, %c3_31] : memref<8x4xf32, #tpu.memory_space<smem>>
    %57 = vector.broadcast %56 : f32 to vector<2x1x1xf32>
    %58 = arith.mulf %57, %10 : vector<2x1x1xf32>
    %59 = arith.addf %55, %58 : vector<2x1x1xf32>
    %cst_32 = arith.constant 0.000000e+00 : f32
    %60 = vector.broadcast %cst_32 : f32 to vector<2x1x1xf32>
    %61 = arith.maximumf %59, %60 : vector<2x1x1xf32>
    %c3_33 = arith.constant 3 : index
    %c0_34 = arith.constant 0 : index
    %62 = memref.load %arg4[%c3_33, %c0_34] : memref<8x4xf32, #tpu.memory_space<smem>>
    %63 = vector.broadcast %62 : f32 to vector<2x1x1xf32>
    %64 = arith.mulf %63, %7 : vector<2x1x1xf32>
    %c3_35 = arith.constant 3 : index
    %c1_36 = arith.constant 1 : index
    %65 = memref.load %arg4[%c3_35, %c1_36] : memref<8x4xf32, #tpu.memory_space<smem>>
    %66 = vector.broadcast %65 : f32 to vector<2x1x1xf32>
    %67 = arith.mulf %66, %8 : vector<2x1x1xf32>
    %68 = arith.addf %64, %67 : vector<2x1x1xf32>
    %c3_37 = arith.constant 3 : index
    %c2_38 = arith.constant 2 : index
    %69 = memref.load %arg4[%c3_37, %c2_38] : memref<8x4xf32, #tpu.memory_space<smem>>
    %70 = vector.broadcast %69 : f32 to vector<2x1x1xf32>
    %71 = arith.mulf %70, %9 : vector<2x1x1xf32>
    %72 = arith.addf %68, %71 : vector<2x1x1xf32>
    %c3_39 = arith.constant 3 : index
    %c3_40 = arith.constant 3 : index
    %73 = memref.load %arg4[%c3_39, %c3_40] : memref<8x4xf32, #tpu.memory_space<smem>>
    %74 = vector.broadcast %73 : f32 to vector<2x1x1xf32>
    %75 = arith.mulf %74, %10 : vector<2x1x1xf32>
    %76 = arith.addf %72, %75 : vector<2x1x1xf32>
    %cst_41 = arith.constant 0.000000e+00 : f32
    %77 = vector.broadcast %cst_41 : f32 to vector<2x1x1xf32>
    %78 = arith.maximumf %76, %77 : vector<2x1x1xf32>
    %c4 = arith.constant 4 : index
    %c0_42 = arith.constant 0 : index
    %79 = memref.load %arg4[%c4, %c0_42] : memref<8x4xf32, #tpu.memory_space<smem>>
    %80 = vector.broadcast %79 : f32 to vector<2x1x1xf32>
    %81 = arith.mulf %80, %7 : vector<2x1x1xf32>
    %c4_43 = arith.constant 4 : index
    %c1_44 = arith.constant 1 : index
    %82 = memref.load %arg4[%c4_43, %c1_44] : memref<8x4xf32, #tpu.memory_space<smem>>
    %83 = vector.broadcast %82 : f32 to vector<2x1x1xf32>
    %84 = arith.mulf %83, %8 : vector<2x1x1xf32>
    %85 = arith.addf %81, %84 : vector<2x1x1xf32>
    %c4_45 = arith.constant 4 : index
    %c2_46 = arith.constant 2 : index
    %86 = memref.load %arg4[%c4_45, %c2_46] : memref<8x4xf32, #tpu.memory_space<smem>>
    %87 = vector.broadcast %86 : f32 to vector<2x1x1xf32>
    %88 = arith.mulf %87, %9 : vector<2x1x1xf32>
    %89 = arith.addf %85, %88 : vector<2x1x1xf32>
    %c4_47 = arith.constant 4 : index
    %c3_48 = arith.constant 3 : index
    %90 = memref.load %arg4[%c4_47, %c3_48] : memref<8x4xf32, #tpu.memory_space<smem>>
    %91 = vector.broadcast %90 : f32 to vector<2x1x1xf32>
    %92 = arith.mulf %91, %10 : vector<2x1x1xf32>
    %93 = arith.addf %89, %92 : vector<2x1x1xf32>
    %cst_49 = arith.constant 0.000000e+00 : f32
    %94 = vector.broadcast %cst_49 : f32 to vector<2x1x1xf32>
    %95 = arith.maximumf %93, %94 : vector<2x1x1xf32>
    %c5 = arith.constant 5 : index
    %c0_50 = arith.constant 0 : index
    %96 = memref.load %arg4[%c5, %c0_50] : memref<8x4xf32, #tpu.memory_space<smem>>
    %97 = vector.broadcast %96 : f32 to vector<2x1x1xf32>
    %98 = arith.mulf %97, %7 : vector<2x1x1xf32>
    %c5_51 = arith.constant 5 : index
    %c1_52 = arith.constant 1 : index
    %99 = memref.load %arg4[%c5_51, %c1_52] : memref<8x4xf32, #tpu.memory_space<smem>>
    %100 = vector.broadcast %99 : f32 to vector<2x1x1xf32>
    %101 = arith.mulf %100, %8 : vector<2x1x1xf32>
    %102 = arith.addf %98, %101 : vector<2x1x1xf32>
    %c5_53 = arith.constant 5 : index
    %c2_54 = arith.constant 2 : index
    %103 = memref.load %arg4[%c5_53, %c2_54] : memref<8x4xf32, #tpu.memory_space<smem>>
    %104 = vector.broadcast %103 : f32 to vector<2x1x1xf32>
    %105 = arith.mulf %104, %9 : vector<2x1x1xf32>
    %106 = arith.addf %102, %105 : vector<2x1x1xf32>
    %c5_55 = arith.constant 5 : index
    %c3_56 = arith.constant 3 : index
    %107 = memref.load %arg4[%c5_55, %c3_56] : memref<8x4xf32, #tpu.memory_space<smem>>
    %108 = vector.broadcast %107 : f32 to vector<2x1x1xf32>
    %109 = arith.mulf %108, %10 : vector<2x1x1xf32>
    %110 = arith.addf %106, %109 : vector<2x1x1xf32>
    %cst_57 = arith.constant 0.000000e+00 : f32
    %111 = vector.broadcast %cst_57 : f32 to vector<2x1x1xf32>
    %112 = arith.maximumf %110, %111 : vector<2x1x1xf32>
    %c6 = arith.constant 6 : index
    %c0_58 = arith.constant 0 : index
    %113 = memref.load %arg4[%c6, %c0_58] : memref<8x4xf32, #tpu.memory_space<smem>>
    %114 = vector.broadcast %113 : f32 to vector<2x1x1xf32>
    %115 = arith.mulf %114, %7 : vector<2x1x1xf32>
    %c6_59 = arith.constant 6 : index
    %c1_60 = arith.constant 1 : index
    %116 = memref.load %arg4[%c6_59, %c1_60] : memref<8x4xf32, #tpu.memory_space<smem>>
    %117 = vector.broadcast %116 : f32 to vector<2x1x1xf32>
    %118 = arith.mulf %117, %8 : vector<2x1x1xf32>
    %119 = arith.addf %115, %118 : vector<2x1x1xf32>
    %c6_61 = arith.constant 6 : index
    %c2_62 = arith.constant 2 : index
    %120 = memref.load %arg4[%c6_61, %c2_62] : memref<8x4xf32, #tpu.memory_space<smem>>
    %121 = vector.broadcast %120 : f32 to vector<2x1x1xf32>
    %122 = arith.mulf %121, %9 : vector<2x1x1xf32>
    %123 = arith.addf %119, %122 : vector<2x1x1xf32>
    %c6_63 = arith.constant 6 : index
    %c3_64 = arith.constant 3 : index
    %124 = memref.load %arg4[%c6_63, %c3_64] : memref<8x4xf32, #tpu.memory_space<smem>>
    %125 = vector.broadcast %124 : f32 to vector<2x1x1xf32>
    %126 = arith.mulf %125, %10 : vector<2x1x1xf32>
    %127 = arith.addf %123, %126 : vector<2x1x1xf32>
    %cst_65 = arith.constant 0.000000e+00 : f32
    %128 = vector.broadcast %cst_65 : f32 to vector<2x1x1xf32>
    %129 = arith.maximumf %127, %128 : vector<2x1x1xf32>
    %c7 = arith.constant 7 : index
    %c0_66 = arith.constant 0 : index
    %130 = memref.load %arg4[%c7, %c0_66] : memref<8x4xf32, #tpu.memory_space<smem>>
    %131 = vector.broadcast %130 : f32 to vector<2x1x1xf32>
    %132 = arith.mulf %131, %7 : vector<2x1x1xf32>
    %c7_67 = arith.constant 7 : index
    %c1_68 = arith.constant 1 : index
    %133 = memref.load %arg4[%c7_67, %c1_68] : memref<8x4xf32, #tpu.memory_space<smem>>
    %134 = vector.broadcast %133 : f32 to vector<2x1x1xf32>
    %135 = arith.mulf %134, %8 : vector<2x1x1xf32>
    %136 = arith.addf %132, %135 : vector<2x1x1xf32>
    %c7_69 = arith.constant 7 : index
    %c2_70 = arith.constant 2 : index
    %137 = memref.load %arg4[%c7_69, %c2_70] : memref<8x4xf32, #tpu.memory_space<smem>>
    %138 = vector.broadcast %137 : f32 to vector<2x1x1xf32>
    %139 = arith.mulf %138, %9 : vector<2x1x1xf32>
    %140 = arith.addf %136, %139 : vector<2x1x1xf32>
    %c7_71 = arith.constant 7 : index
    %c3_72 = arith.constant 3 : index
    %141 = memref.load %arg4[%c7_71, %c3_72] : memref<8x4xf32, #tpu.memory_space<smem>>
    %142 = vector.broadcast %141 : f32 to vector<2x1x1xf32>
    %143 = arith.mulf %142, %10 : vector<2x1x1xf32>
    %144 = arith.addf %140, %143 : vector<2x1x1xf32>
    %cst_73 = arith.constant 0.000000e+00 : f32
    %145 = vector.broadcast %cst_73 : f32 to vector<2x1x1xf32>
    %146 = arith.maximumf %144, %145 : vector<2x1x1xf32>
    %c0_74 = arith.constant 0 : index
    %c0_75 = arith.constant 0 : index
    %147 = memref.load %arg5[%c0_74, %c0_75] : memref<4x8xf32, #tpu.memory_space<smem>>
    %148 = vector.broadcast %147 : f32 to vector<2x1x1xf32>
    %149 = arith.mulf %148, %27 : vector<2x1x1xf32>
    %c0_76 = arith.constant 0 : index
    %c1_77 = arith.constant 1 : index
    %150 = memref.load %arg5[%c0_76, %c1_77] : memref<4x8xf32, #tpu.memory_space<smem>>
    %151 = vector.broadcast %150 : f32 to vector<2x1x1xf32>
    %152 = arith.mulf %151, %44 : vector<2x1x1xf32>
    %153 = arith.addf %149, %152 : vector<2x1x1xf32>
    %c0_78 = arith.constant 0 : index
    %c2_79 = arith.constant 2 : index
    %154 = memref.load %arg5[%c0_78, %c2_79] : memref<4x8xf32, #tpu.memory_space<smem>>
    %155 = vector.broadcast %154 : f32 to vector<2x1x1xf32>
    %156 = arith.mulf %155, %61 : vector<2x1x1xf32>
    %157 = arith.addf %153, %156 : vector<2x1x1xf32>
    %c0_80 = arith.constant 0 : index
    %c3_81 = arith.constant 3 : index
    %158 = memref.load %arg5[%c0_80, %c3_81] : memref<4x8xf32, #tpu.memory_space<smem>>
    %159 = vector.broadcast %158 : f32 to vector<2x1x1xf32>
    %160 = arith.mulf %159, %78 : vector<2x1x1xf32>
    %161 = arith.addf %157, %160 : vector<2x1x1xf32>
    %c0_82 = arith.constant 0 : index
    %c4_83 = arith.constant 4 : index
    %162 = memref.load %arg5[%c0_82, %c4_83] : memref<4x8xf32, #tpu.memory_space<smem>>
    %163 = vector.broadcast %162 : f32 to vector<2x1x1xf32>
    %164 = arith.mulf %163, %95 : vector<2x1x1xf32>
    %165 = arith.addf %161, %164 : vector<2x1x1xf32>
    %c0_84 = arith.constant 0 : index
    %c5_85 = arith.constant 5 : index
    %166 = memref.load %arg5[%c0_84, %c5_85] : memref<4x8xf32, #tpu.memory_space<smem>>
    %167 = vector.broadcast %166 : f32 to vector<2x1x1xf32>
    %168 = arith.mulf %167, %112 : vector<2x1x1xf32>
    %169 = arith.addf %165, %168 : vector<2x1x1xf32>
    %c0_86 = arith.constant 0 : index
    %c6_87 = arith.constant 6 : index
    %170 = memref.load %arg5[%c0_86, %c6_87] : memref<4x8xf32, #tpu.memory_space<smem>>
    %171 = vector.broadcast %170 : f32 to vector<2x1x1xf32>
    %172 = arith.mulf %171, %129 : vector<2x1x1xf32>
    %173 = arith.addf %169, %172 : vector<2x1x1xf32>
    %c0_88 = arith.constant 0 : index
    %c7_89 = arith.constant 7 : index
    %174 = memref.load %arg5[%c0_88, %c7_89] : memref<4x8xf32, #tpu.memory_space<smem>>
    %175 = vector.broadcast %174 : f32 to vector<2x1x1xf32>
    %176 = arith.mulf %175, %146 : vector<2x1x1xf32>
    %177 = arith.addf %173, %176 : vector<2x1x1xf32>
    %178 = arith.negf %177 : vector<2x1x1xf32>
    %179 = math.exp %178 : vector<2x1x1xf32>
    %cst_90 = arith.constant 1.000000e+00 : f32
    %180 = vector.broadcast %cst_90 : f32 to vector<2x1x1xf32>
    %181 = arith.addf %180, %179 : vector<2x1x1xf32>
    %182 = arith.divf %180, %181 : vector<2x1x1xf32>
    %c1_91 = arith.constant 1 : index
    %c0_92 = arith.constant 0 : index
    %183 = memref.load %arg5[%c1_91, %c0_92] : memref<4x8xf32, #tpu.memory_space<smem>>
    %184 = vector.broadcast %183 : f32 to vector<2x1x1xf32>
    %185 = arith.mulf %184, %27 : vector<2x1x1xf32>
    %c1_93 = arith.constant 1 : index
    %c1_94 = arith.constant 1 : index
    %186 = memref.load %arg5[%c1_93, %c1_94] : memref<4x8xf32, #tpu.memory_space<smem>>
    %187 = vector.broadcast %186 : f32 to vector<2x1x1xf32>
    %188 = arith.mulf %187, %44 : vector<2x1x1xf32>
    %189 = arith.addf %185, %188 : vector<2x1x1xf32>
    %c1_95 = arith.constant 1 : index
    %c2_96 = arith.constant 2 : index
    %190 = memref.load %arg5[%c1_95, %c2_96] : memref<4x8xf32, #tpu.memory_space<smem>>
    %191 = vector.broadcast %190 : f32 to vector<2x1x1xf32>
    %192 = arith.mulf %191, %61 : vector<2x1x1xf32>
    %193 = arith.addf %189, %192 : vector<2x1x1xf32>
    %c1_97 = arith.constant 1 : index
    %c3_98 = arith.constant 3 : index
    %194 = memref.load %arg5[%c1_97, %c3_98] : memref<4x8xf32, #tpu.memory_space<smem>>
    %195 = vector.broadcast %194 : f32 to vector<2x1x1xf32>
    %196 = arith.mulf %195, %78 : vector<2x1x1xf32>
    %197 = arith.addf %193, %196 : vector<2x1x1xf32>
    %c1_99 = arith.constant 1 : index
    %c4_100 = arith.constant 4 : index
    %198 = memref.load %arg5[%c1_99, %c4_100] : memref<4x8xf32, #tpu.memory_space<smem>>
    %199 = vector.broadcast %198 : f32 to vector<2x1x1xf32>
    %200 = arith.mulf %199, %95 : vector<2x1x1xf32>
    %201 = arith.addf %197, %200 : vector<2x1x1xf32>
    %c1_101 = arith.constant 1 : index
    %c5_102 = arith.constant 5 : index
    %202 = memref.load %arg5[%c1_101, %c5_102] : memref<4x8xf32, #tpu.memory_space<smem>>
    %203 = vector.broadcast %202 : f32 to vector<2x1x1xf32>
    %204 = arith.mulf %203, %112 : vector<2x1x1xf32>
    %205 = arith.addf %201, %204 : vector<2x1x1xf32>
    %c1_103 = arith.constant 1 : index
    %c6_104 = arith.constant 6 : index
    %206 = memref.load %arg5[%c1_103, %c6_104] : memref<4x8xf32, #tpu.memory_space<smem>>
    %207 = vector.broadcast %206 : f32 to vector<2x1x1xf32>
    %208 = arith.mulf %207, %129 : vector<2x1x1xf32>
    %209 = arith.addf %205, %208 : vector<2x1x1xf32>
    %c1_105 = arith.constant 1 : index
    %c7_106 = arith.constant 7 : index
    %210 = memref.load %arg5[%c1_105, %c7_106] : memref<4x8xf32, #tpu.memory_space<smem>>
    %211 = vector.broadcast %210 : f32 to vector<2x1x1xf32>
    %212 = arith.mulf %211, %146 : vector<2x1x1xf32>
    %213 = arith.addf %209, %212 : vector<2x1x1xf32>
    %214 = arith.negf %213 : vector<2x1x1xf32>
    %215 = math.exp %214 : vector<2x1x1xf32>
    %cst_107 = arith.constant 1.000000e+00 : f32
    %216 = vector.broadcast %cst_107 : f32 to vector<2x1x1xf32>
    %217 = arith.addf %216, %215 : vector<2x1x1xf32>
    %218 = arith.divf %216, %217 : vector<2x1x1xf32>
    %c2_108 = arith.constant 2 : index
    %c0_109 = arith.constant 0 : index
    %219 = memref.load %arg5[%c2_108, %c0_109] : memref<4x8xf32, #tpu.memory_space<smem>>
    %220 = vector.broadcast %219 : f32 to vector<2x1x1xf32>
    %221 = arith.mulf %220, %27 : vector<2x1x1xf32>
    %c2_110 = arith.constant 2 : index
    %c1_111 = arith.constant 1 : index
    %222 = memref.load %arg5[%c2_110, %c1_111] : memref<4x8xf32, #tpu.memory_space<smem>>
    %223 = vector.broadcast %222 : f32 to vector<2x1x1xf32>
    %224 = arith.mulf %223, %44 : vector<2x1x1xf32>
    %225 = arith.addf %221, %224 : vector<2x1x1xf32>
    %c2_112 = arith.constant 2 : index
    %c2_113 = arith.constant 2 : index
    %226 = memref.load %arg5[%c2_112, %c2_113] : memref<4x8xf32, #tpu.memory_space<smem>>
    %227 = vector.broadcast %226 : f32 to vector<2x1x1xf32>
    %228 = arith.mulf %227, %61 : vector<2x1x1xf32>
    %229 = arith.addf %225, %228 : vector<2x1x1xf32>
    %c2_114 = arith.constant 2 : index
    %c3_115 = arith.constant 3 : index
    %230 = memref.load %arg5[%c2_114, %c3_115] : memref<4x8xf32, #tpu.memory_space<smem>>
    %231 = vector.broadcast %230 : f32 to vector<2x1x1xf32>
    %232 = arith.mulf %231, %78 : vector<2x1x1xf32>
    %233 = arith.addf %229, %232 : vector<2x1x1xf32>
    %c2_116 = arith.constant 2 : index
    %c4_117 = arith.constant 4 : index
    %234 = memref.load %arg5[%c2_116, %c4_117] : memref<4x8xf32, #tpu.memory_space<smem>>
    %235 = vector.broadcast %234 : f32 to vector<2x1x1xf32>
    %236 = arith.mulf %235, %95 : vector<2x1x1xf32>
    %237 = arith.addf %233, %236 : vector<2x1x1xf32>
    %c2_118 = arith.constant 2 : index
    %c5_119 = arith.constant 5 : index
    %238 = memref.load %arg5[%c2_118, %c5_119] : memref<4x8xf32, #tpu.memory_space<smem>>
    %239 = vector.broadcast %238 : f32 to vector<2x1x1xf32>
    %240 = arith.mulf %239, %112 : vector<2x1x1xf32>
    %241 = arith.addf %237, %240 : vector<2x1x1xf32>
    %c2_120 = arith.constant 2 : index
    %c6_121 = arith.constant 6 : index
    %242 = memref.load %arg5[%c2_120, %c6_121] : memref<4x8xf32, #tpu.memory_space<smem>>
    %243 = vector.broadcast %242 : f32 to vector<2x1x1xf32>
    %244 = arith.mulf %243, %129 : vector<2x1x1xf32>
    %245 = arith.addf %241, %244 : vector<2x1x1xf32>
    %c2_122 = arith.constant 2 : index
    %c7_123 = arith.constant 7 : index
    %246 = memref.load %arg5[%c2_122, %c7_123] : memref<4x8xf32, #tpu.memory_space<smem>>
    %247 = vector.broadcast %246 : f32 to vector<2x1x1xf32>
    %248 = arith.mulf %247, %146 : vector<2x1x1xf32>
    %249 = arith.addf %245, %248 : vector<2x1x1xf32>
    %250 = arith.negf %249 : vector<2x1x1xf32>
    %251 = math.exp %250 : vector<2x1x1xf32>
    %cst_124 = arith.constant 1.000000e+00 : f32
    %252 = vector.broadcast %cst_124 : f32 to vector<2x1x1xf32>
    %253 = arith.addf %252, %251 : vector<2x1x1xf32>
    %254 = arith.divf %252, %253 : vector<2x1x1xf32>
    %c3_125 = arith.constant 3 : index
    %c0_126 = arith.constant 0 : index
    %255 = memref.load %arg5[%c3_125, %c0_126] : memref<4x8xf32, #tpu.memory_space<smem>>
    %256 = vector.broadcast %255 : f32 to vector<2x1x1xf32>
    %257 = arith.mulf %256, %27 : vector<2x1x1xf32>
    %c3_127 = arith.constant 3 : index
    %c1_128 = arith.constant 1 : index
    %258 = memref.load %arg5[%c3_127, %c1_128] : memref<4x8xf32, #tpu.memory_space<smem>>
    %259 = vector.broadcast %258 : f32 to vector<2x1x1xf32>
    %260 = arith.mulf %259, %44 : vector<2x1x1xf32>
    %261 = arith.addf %257, %260 : vector<2x1x1xf32>
    %c3_129 = arith.constant 3 : index
    %c2_130 = arith.constant 2 : index
    %262 = memref.load %arg5[%c3_129, %c2_130] : memref<4x8xf32, #tpu.memory_space<smem>>
    %263 = vector.broadcast %262 : f32 to vector<2x1x1xf32>
    %264 = arith.mulf %263, %61 : vector<2x1x1xf32>
    %265 = arith.addf %261, %264 : vector<2x1x1xf32>
    %c3_131 = arith.constant 3 : index
    %c3_132 = arith.constant 3 : index
    %266 = memref.load %arg5[%c3_131, %c3_132] : memref<4x8xf32, #tpu.memory_space<smem>>
    %267 = vector.broadcast %266 : f32 to vector<2x1x1xf32>
    %268 = arith.mulf %267, %78 : vector<2x1x1xf32>
    %269 = arith.addf %265, %268 : vector<2x1x1xf32>
    %c3_133 = arith.constant 3 : index
    %c4_134 = arith.constant 4 : index
    %270 = memref.load %arg5[%c3_133, %c4_134] : memref<4x8xf32, #tpu.memory_space<smem>>
    %271 = vector.broadcast %270 : f32 to vector<2x1x1xf32>
    %272 = arith.mulf %271, %95 : vector<2x1x1xf32>
    %273 = arith.addf %269, %272 : vector<2x1x1xf32>
    %c3_135 = arith.constant 3 : index
    %c5_136 = arith.constant 5 : index
    %274 = memref.load %arg5[%c3_135, %c5_136] : memref<4x8xf32, #tpu.memory_space<smem>>
    %275 = vector.broadcast %274 : f32 to vector<2x1x1xf32>
    %276 = arith.mulf %275, %112 : vector<2x1x1xf32>
    %277 = arith.addf %273, %276 : vector<2x1x1xf32>
    %c3_137 = arith.constant 3 : index
    %c6_138 = arith.constant 6 : index
    %278 = memref.load %arg5[%c3_137, %c6_138] : memref<4x8xf32, #tpu.memory_space<smem>>
    %279 = vector.broadcast %278 : f32 to vector<2x1x1xf32>
    %280 = arith.mulf %279, %129 : vector<2x1x1xf32>
    %281 = arith.addf %277, %280 : vector<2x1x1xf32>
    %c3_139 = arith.constant 3 : index
    %c7_140 = arith.constant 7 : index
    %282 = memref.load %arg5[%c3_139, %c7_140] : memref<4x8xf32, #tpu.memory_space<smem>>
    %283 = vector.broadcast %282 : f32 to vector<2x1x1xf32>
    %284 = arith.mulf %283, %146 : vector<2x1x1xf32>
    %285 = arith.addf %281, %284 : vector<2x1x1xf32>
    %286 = arith.negf %285 : vector<2x1x1xf32>
    %287 = math.exp %286 : vector<2x1x1xf32>
    %cst_141 = arith.constant 1.000000e+00 : f32
    %288 = vector.broadcast %cst_141 : f32 to vector<2x1x1xf32>
    %289 = arith.addf %288, %287 : vector<2x1x1xf32>
    %290 = arith.divf %288, %289 : vector<2x1x1xf32>
    %291 = arith.addf %182, %218 : vector<2x1x1xf32>
    %292 = arith.addf %291, %254 : vector<2x1x1xf32>
    %293 = arith.addf %292, %290 : vector<2x1x1xf32>
    %cst_142 = arith.constant 2.500000e-01 : f32
    %294 = vector.broadcast %cst_142 : f32 to vector<2x1x1xf32>
    %295 = arith.mulf %293, %294 : vector<2x1x1xf32>
    %cst_143 = arith.constant dense<0.000000e+00> : vector<2x256xf32>
    %296 = vector.multi_reduction <add>, %0, %cst_143 [1] : vector<2x4x256xf32> to vector<2x256xf32>
    %297 = vector.shape_cast %296 : vector<2x256xf32> to vector<2x1x256xf32>
    %cst_144 = arith.constant 4.000000e+00 : f32
    %298 = vector.broadcast %cst_144 : f32 to vector<2x1x256xf32>
    %299 = arith.divf %297, %298 : vector<2x1x256xf32>
    %300 = vector.broadcast %295 : vector<2x1x1xf32> to vector<2x1x256xf32>
    %301 = arith.addf %299, %300 : vector<2x1x256xf32>
    %c1_145 = arith.constant 1 : index
    %c1_146 = arith.constant 1 : index
    %302 = memref.load %arg6[%c1_145, %c1_146] : memref<3x3xf32, #tpu.memory_space<smem>>
    %303 = vector.broadcast %302 : f32 to vector<2x1x256xf32>
    %304 = arith.mulf %303, %301 : vector<2x1x256xf32>
    %c17_i32 = arith.constant 17 : i32
    %305 = tpu.dynamic_rotate %301 by %c17_i32 dim 2 : vector<2x1x256xf32>, i32 -> vector<2x1x256xf32>
    %c1_i32 = arith.constant 1 : i32
    %306 = vector.broadcast %c1_i32 : i32 to vector<1x1x256xi32>
    %307 = arith.cmpi sge, %1, %306 : vector<1x1x256xi32>
    %c1_i32_147 = arith.constant 1 : i32
    %308 = vector.broadcast %c1_i32_147 : i32 to vector<1x1x256xi32>
    %309 = arith.cmpi sge, %2, %308 : vector<1x1x256xi32>
    %310 = arith.andi %307, %309 : vector<1x1x256xi1>
    %c0_148 = arith.constant 0 : index
    %c0_149 = arith.constant 0 : index
    %311 = memref.load %arg6[%c0_148, %c0_149] : memref<3x3xf32, #tpu.memory_space<smem>>
    %cst_150 = arith.constant 0.000000e+00 : f32
    %312 = vector.shape_cast %310 : vector<1x1x256xi1> to vector<1x1x256xi1>
    %313 = vector.broadcast %312 : vector<1x1x256xi1> to vector<2x1x256xi1>
    %314 = vector.broadcast %cst_150 : f32 to vector<2x1x256xf32>
    %315 = arith.select %313, %305, %314 : vector<2x1x256xi1>, vector<2x1x256xf32>
    %316 = vector.broadcast %311 : f32 to vector<2x1x256xf32>
    %317 = arith.mulf %316, %315 : vector<2x1x256xf32>
    %318 = arith.addf %304, %317 : vector<2x1x256xf32>
    %c16_i32 = arith.constant 16 : i32
    %319 = tpu.dynamic_rotate %301 by %c16_i32 dim 2 : vector<2x1x256xf32>, i32 -> vector<2x1x256xf32>
    %c1_i32_151 = arith.constant 1 : i32
    %320 = vector.broadcast %c1_i32_151 : i32 to vector<1x1x256xi32>
    %321 = arith.cmpi sge, %1, %320 : vector<1x1x256xi32>
    %c0_152 = arith.constant 0 : index
    %c1_153 = arith.constant 1 : index
    %322 = memref.load %arg6[%c0_152, %c1_153] : memref<3x3xf32, #tpu.memory_space<smem>>
    %cst_154 = arith.constant 0.000000e+00 : f32
    %323 = vector.shape_cast %321 : vector<1x1x256xi1> to vector<1x1x256xi1>
    %324 = vector.broadcast %323 : vector<1x1x256xi1> to vector<2x1x256xi1>
    %325 = vector.broadcast %cst_154 : f32 to vector<2x1x256xf32>
    %326 = arith.select %324, %319, %325 : vector<2x1x256xi1>, vector<2x1x256xf32>
    %327 = vector.broadcast %322 : f32 to vector<2x1x256xf32>
    %328 = arith.mulf %327, %326 : vector<2x1x256xf32>
    %329 = arith.addf %318, %328 : vector<2x1x256xf32>
    %c15_i32 = arith.constant 15 : i32
    %330 = tpu.dynamic_rotate %301 by %c15_i32 dim 2 : vector<2x1x256xf32>, i32 -> vector<2x1x256xf32>
    %c1_i32_155 = arith.constant 1 : i32
    %331 = vector.broadcast %c1_i32_155 : i32 to vector<1x1x256xi32>
    %332 = arith.cmpi sge, %1, %331 : vector<1x1x256xi32>
    %c14_i32 = arith.constant 14 : i32
    %333 = vector.broadcast %c14_i32 : i32 to vector<1x1x256xi32>
    %334 = arith.cmpi sle, %2, %333 : vector<1x1x256xi32>
    %335 = arith.andi %332, %334 : vector<1x1x256xi1>
    %c0_156 = arith.constant 0 : index
    %c2_157 = arith.constant 2 : index
    %336 = memref.load %arg6[%c0_156, %c2_157] : memref<3x3xf32, #tpu.memory_space<smem>>
    %cst_158 = arith.constant 0.000000e+00 : f32
    %337 = vector.shape_cast %335 : vector<1x1x256xi1> to vector<1x1x256xi1>
    %338 = vector.broadcast %337 : vector<1x1x256xi1> to vector<2x1x256xi1>
    %339 = vector.broadcast %cst_158 : f32 to vector<2x1x256xf32>
    %340 = arith.select %338, %330, %339 : vector<2x1x256xi1>, vector<2x1x256xf32>
    %341 = vector.broadcast %336 : f32 to vector<2x1x256xf32>
    %342 = arith.mulf %341, %340 : vector<2x1x256xf32>
    %343 = arith.addf %329, %342 : vector<2x1x256xf32>
    %c1_i32_159 = arith.constant 1 : i32
    %344 = tpu.dynamic_rotate %301 by %c1_i32_159 dim 2 : vector<2x1x256xf32>, i32 -> vector<2x1x256xf32>
    %c1_i32_160 = arith.constant 1 : i32
    %345 = vector.broadcast %c1_i32_160 : i32 to vector<1x1x256xi32>
    %346 = arith.cmpi sge, %2, %345 : vector<1x1x256xi32>
    %c1_161 = arith.constant 1 : index
    %c0_162 = arith.constant 0 : index
    %347 = memref.load %arg6[%c1_161, %c0_162] : memref<3x3xf32, #tpu.memory_space<smem>>
    %cst_163 = arith.constant 0.000000e+00 : f32
    %348 = vector.shape_cast %346 : vector<1x1x256xi1> to vector<1x1x256xi1>
    %349 = vector.broadcast %348 : vector<1x1x256xi1> to vector<2x1x256xi1>
    %350 = vector.broadcast %cst_163 : f32 to vector<2x1x256xf32>
    %351 = arith.select %349, %344, %350 : vector<2x1x256xi1>, vector<2x1x256xf32>
    %352 = vector.broadcast %347 : f32 to vector<2x1x256xf32>
    %353 = arith.mulf %352, %351 : vector<2x1x256xf32>
    %354 = arith.addf %343, %353 : vector<2x1x256xf32>
    %c255_i32 = arith.constant 255 : i32
    %355 = tpu.dynamic_rotate %301 by %c255_i32 dim 2 : vector<2x1x256xf32>, i32 -> vector<2x1x256xf32>
    %c14_i32_164 = arith.constant 14 : i32
    %356 = vector.broadcast %c14_i32_164 : i32 to vector<1x1x256xi32>
    %357 = arith.cmpi sle, %2, %356 : vector<1x1x256xi32>
    %c1_165 = arith.constant 1 : index
    %c2_166 = arith.constant 2 : index
    %358 = memref.load %arg6[%c1_165, %c2_166] : memref<3x3xf32, #tpu.memory_space<smem>>
    %cst_167 = arith.constant 0.000000e+00 : f32
    %359 = vector.shape_cast %357 : vector<1x1x256xi1> to vector<1x1x256xi1>
    %360 = vector.broadcast %359 : vector<1x1x256xi1> to vector<2x1x256xi1>
    %361 = vector.broadcast %cst_167 : f32 to vector<2x1x256xf32>
    %362 = arith.select %360, %355, %361 : vector<2x1x256xi1>, vector<2x1x256xf32>
    %363 = vector.broadcast %358 : f32 to vector<2x1x256xf32>
    %364 = arith.mulf %363, %362 : vector<2x1x256xf32>
    %365 = arith.addf %354, %364 : vector<2x1x256xf32>
    %c241_i32 = arith.constant 241 : i32
    %366 = tpu.dynamic_rotate %301 by %c241_i32 dim 2 : vector<2x1x256xf32>, i32 -> vector<2x1x256xf32>
    %c14_i32_168 = arith.constant 14 : i32
    %367 = vector.broadcast %c14_i32_168 : i32 to vector<1x1x256xi32>
    %368 = arith.cmpi sle, %1, %367 : vector<1x1x256xi32>
    %c1_i32_169 = arith.constant 1 : i32
    %369 = vector.broadcast %c1_i32_169 : i32 to vector<1x1x256xi32>
    %370 = arith.cmpi sge, %2, %369 : vector<1x1x256xi32>
    %371 = arith.andi %368, %370 : vector<1x1x256xi1>
    %c2_170 = arith.constant 2 : index
    %c0_171 = arith.constant 0 : index
    %372 = memref.load %arg6[%c2_170, %c0_171] : memref<3x3xf32, #tpu.memory_space<smem>>
    %cst_172 = arith.constant 0.000000e+00 : f32
    %373 = vector.shape_cast %371 : vector<1x1x256xi1> to vector<1x1x256xi1>
    %374 = vector.broadcast %373 : vector<1x1x256xi1> to vector<2x1x256xi1>
    %375 = vector.broadcast %cst_172 : f32 to vector<2x1x256xf32>
    %376 = arith.select %374, %366, %375 : vector<2x1x256xi1>, vector<2x1x256xf32>
    %377 = vector.broadcast %372 : f32 to vector<2x1x256xf32>
    %378 = arith.mulf %377, %376 : vector<2x1x256xf32>
    %379 = arith.addf %365, %378 : vector<2x1x256xf32>
    %c240_i32 = arith.constant 240 : i32
    %380 = tpu.dynamic_rotate %301 by %c240_i32 dim 2 : vector<2x1x256xf32>, i32 -> vector<2x1x256xf32>
    %c14_i32_173 = arith.constant 14 : i32
    %381 = vector.broadcast %c14_i32_173 : i32 to vector<1x1x256xi32>
    %382 = arith.cmpi sle, %1, %381 : vector<1x1x256xi32>
    %c2_174 = arith.constant 2 : index
    %c1_175 = arith.constant 1 : index
    %383 = memref.load %arg6[%c2_174, %c1_175] : memref<3x3xf32, #tpu.memory_space<smem>>
    %cst_176 = arith.constant 0.000000e+00 : f32
    %384 = vector.shape_cast %382 : vector<1x1x256xi1> to vector<1x1x256xi1>
    %385 = vector.broadcast %384 : vector<1x1x256xi1> to vector<2x1x256xi1>
    %386 = vector.broadcast %cst_176 : f32 to vector<2x1x256xf32>
    %387 = arith.select %385, %380, %386 : vector<2x1x256xi1>, vector<2x1x256xf32>
    %388 = vector.broadcast %383 : f32 to vector<2x1x256xf32>
    %389 = arith.mulf %388, %387 : vector<2x1x256xf32>
    %390 = arith.addf %379, %389 : vector<2x1x256xf32>
    %c239_i32 = arith.constant 239 : i32
    %391 = tpu.dynamic_rotate %301 by %c239_i32 dim 2 : vector<2x1x256xf32>, i32 -> vector<2x1x256xf32>
    %c14_i32_177 = arith.constant 14 : i32
    %392 = vector.broadcast %c14_i32_177 : i32 to vector<1x1x256xi32>
    %393 = arith.cmpi sle, %1, %392 : vector<1x1x256xi32>
    %c14_i32_178 = arith.constant 14 : i32
    %394 = vector.broadcast %c14_i32_178 : i32 to vector<1x1x256xi32>
    %395 = arith.cmpi sle, %2, %394 : vector<1x1x256xi32>
    %396 = arith.andi %393, %395 : vector<1x1x256xi1>
    %c2_179 = arith.constant 2 : index
    %c2_180 = arith.constant 2 : index
    %397 = memref.load %arg6[%c2_179, %c2_180] : memref<3x3xf32, #tpu.memory_space<smem>>
    %cst_181 = arith.constant 0.000000e+00 : f32
    %398 = vector.shape_cast %396 : vector<1x1x256xi1> to vector<1x1x256xi1>
    %399 = vector.broadcast %398 : vector<1x1x256xi1> to vector<2x1x256xi1>
    %400 = vector.broadcast %cst_181 : f32 to vector<2x1x256xf32>
    %401 = arith.select %399, %391, %400 : vector<2x1x256xi1>, vector<2x1x256xf32>
    %402 = vector.broadcast %397 : f32 to vector<2x1x256xf32>
    %403 = arith.mulf %402, %401 : vector<2x1x256xf32>
    %404 = arith.addf %390, %403 : vector<2x1x256xf32>
    %c0_182 = arith.constant 0 : index
    %c0_183 = arith.constant 0 : index
    %405 = memref.load %arg7[%c0_182, %c0_183] : memref<1x1xf32, #tpu.memory_space<smem>>
    %cst_184 = arith.constant 0.000000e+00 : f32
    %406 = vector.broadcast %cst_184 : f32 to vector<2x1x256xf32>
    %407 = arith.maximumf %404, %406 : vector<2x1x256xf32>
    %408 = vector.broadcast %405 : f32 to vector<2x1x256xf32>
    %409 = arith.mulf %408, %407 : vector<2x1x256xf32>
    %410 = arith.negf %409 : vector<2x1x256xf32>
    %411 = math.exp %410 : vector<2x1x256xf32>
    %cst_185 = arith.constant 1.000000e+00 : f32
    %412 = vector.broadcast %cst_185 : f32 to vector<2x1x256xf32>
    %413 = arith.addf %412, %411 : vector<2x1x256xf32>
    %414 = arith.divf %412, %413 : vector<2x1x256xf32>
    %415 = vector.extract_strided_slice %0 {offsets = [0, 0, 0], sizes = [2, 1, 256], strides = [1, 1, 1]} : vector<2x4x256xf32> to vector<2x1x256xf32>
    %416 = vector.broadcast %182 : vector<2x1x1xf32> to vector<2x1x256xf32>
    %417 = arith.addf %415, %416 : vector<2x1x256xf32>
    %418 = arith.addf %417, %414 : vector<2x1x256xf32>
    %419 = vector.extract_strided_slice %0 {offsets = [0, 1, 0], sizes = [2, 1, 256], strides = [1, 1, 1]} : vector<2x4x256xf32> to vector<2x1x256xf32>
    %420 = vector.broadcast %218 : vector<2x1x1xf32> to vector<2x1x256xf32>
    %421 = arith.addf %419, %420 : vector<2x1x256xf32>
    %422 = arith.addf %421, %414 : vector<2x1x256xf32>
    %423 = vector.extract_strided_slice %0 {offsets = [0, 2, 0], sizes = [2, 1, 256], strides = [1, 1, 1]} : vector<2x4x256xf32> to vector<2x1x256xf32>
    %424 = vector.broadcast %254 : vector<2x1x1xf32> to vector<2x1x256xf32>
    %425 = arith.addf %423, %424 : vector<2x1x256xf32>
    %426 = arith.addf %425, %414 : vector<2x1x256xf32>
    %427 = vector.extract_strided_slice %0 {offsets = [0, 3, 0], sizes = [2, 1, 256], strides = [1, 1, 1]} : vector<2x4x256xf32> to vector<2x1x256xf32>
    %428 = vector.broadcast %290 : vector<2x1x1xf32> to vector<2x1x256xf32>
    %429 = arith.addf %427, %428 : vector<2x1x256xf32>
    %430 = arith.addf %429, %414 : vector<2x1x256xf32>
    %c0_186 = arith.constant 0 : index
    %c0_187 = arith.constant 0 : index
    %431 = memref.load %arg8[%c0_186, %c0_187] : memref<6x4xf32, #tpu.memory_space<smem>>
    %432 = vector.broadcast %431 : f32 to vector<2x1x256xf32>
    %433 = arith.mulf %432, %418 : vector<2x1x256xf32>
    %c0_188 = arith.constant 0 : index
    %c1_189 = arith.constant 1 : index
    %434 = memref.load %arg8[%c0_188, %c1_189] : memref<6x4xf32, #tpu.memory_space<smem>>
    %435 = vector.broadcast %434 : f32 to vector<2x1x256xf32>
    %436 = arith.mulf %435, %422 : vector<2x1x256xf32>
    %437 = arith.addf %433, %436 : vector<2x1x256xf32>
    %c0_190 = arith.constant 0 : index
    %c2_191 = arith.constant 2 : index
    %438 = memref.load %arg8[%c0_190, %c2_191] : memref<6x4xf32, #tpu.memory_space<smem>>
    %439 = vector.broadcast %438 : f32 to vector<2x1x256xf32>
    %440 = arith.mulf %439, %426 : vector<2x1x256xf32>
    %441 = arith.addf %437, %440 : vector<2x1x256xf32>
    %c0_192 = arith.constant 0 : index
    %c3_193 = arith.constant 3 : index
    %442 = memref.load %arg8[%c0_192, %c3_193] : memref<6x4xf32, #tpu.memory_space<smem>>
    %443 = vector.broadcast %442 : f32 to vector<2x1x256xf32>
    %444 = arith.mulf %443, %430 : vector<2x1x256xf32>
    %445 = arith.addf %441, %444 : vector<2x1x256xf32>
    %446 = arith.negf %445 : vector<2x1x256xf32>
    %447 = math.exp %446 : vector<2x1x256xf32>
    %cst_194 = arith.constant 1.000000e+00 : f32
    %448 = vector.broadcast %cst_194 : f32 to vector<2x1x256xf32>
    %449 = arith.addf %448, %447 : vector<2x1x256xf32>
    %450 = arith.divf %448, %449 : vector<2x1x256xf32>
    %c0_195 = arith.constant 0 : index
    %c0_196 = arith.constant 0 : index
    %c0_197 = arith.constant 0 : index
    %451 = vector.load %arg9[%c0_195, %c0_196, %c0_197] : memref<2x6x256xf32, #tpu.memory_space<vmem>>, vector<2x1x256xf32>
    tpu.vector_store %arg9[%c0_195, %c0_196, %c0_197], %450 {strides = array<i32>} : memref<2x6x256xf32, #tpu.memory_space<vmem>>, vector<2x1x256xf32>,
    %c1_198 = arith.constant 1 : index
    %c0_199 = arith.constant 0 : index
    %452 = memref.load %arg8[%c1_198, %c0_199] : memref<6x4xf32, #tpu.memory_space<smem>>
    %453 = vector.broadcast %452 : f32 to vector<2x1x256xf32>
    %454 = arith.mulf %453, %418 : vector<2x1x256xf32>
    %c1_200 = arith.constant 1 : index
    %c1_201 = arith.constant 1 : index
    %455 = memref.load %arg8[%c1_200, %c1_201] : memref<6x4xf32, #tpu.memory_space<smem>>
    %456 = vector.broadcast %455 : f32 to vector<2x1x256xf32>
    %457 = arith.mulf %456, %422 : vector<2x1x256xf32>
    %458 = arith.addf %454, %457 : vector<2x1x256xf32>
    %c1_202 = arith.constant 1 : index
    %c2_203 = arith.constant 2 : index
    %459 = memref.load %arg8[%c1_202, %c2_203] : memref<6x4xf32, #tpu.memory_space<smem>>
    %460 = vector.broadcast %459 : f32 to vector<2x1x256xf32>
    %461 = arith.mulf %460, %426 : vector<2x1x256xf32>
    %462 = arith.addf %458, %461 : vector<2x1x256xf32>
    %c1_204 = arith.constant 1 : index
    %c3_205 = arith.constant 3 : index
    %463 = memref.load %arg8[%c1_204, %c3_205] : memref<6x4xf32, #tpu.memory_space<smem>>
    %464 = vector.broadcast %463 : f32 to vector<2x1x256xf32>
    %465 = arith.mulf %464, %430 : vector<2x1x256xf32>
    %466 = arith.addf %462, %465 : vector<2x1x256xf32>
    %467 = arith.negf %466 : vector<2x1x256xf32>
    %468 = math.exp %467 : vector<2x1x256xf32>
    %cst_206 = arith.constant 1.000000e+00 : f32
    %469 = vector.broadcast %cst_206 : f32 to vector<2x1x256xf32>
    %470 = arith.addf %469, %468 : vector<2x1x256xf32>
    %471 = arith.divf %469, %470 : vector<2x1x256xf32>
    %c0_207 = arith.constant 0 : index
    %c1_208 = arith.constant 1 : index
    %c0_209 = arith.constant 0 : index
    %472 = vector.load %arg9[%c0_207, %c1_208, %c0_209] : memref<2x6x256xf32, #tpu.memory_space<vmem>>, vector<2x1x256xf32>
    tpu.vector_store %arg9[%c0_207, %c1_208, %c0_209], %471 {strides = array<i32>} : memref<2x6x256xf32, #tpu.memory_space<vmem>>, vector<2x1x256xf32>,
    %c2_210 = arith.constant 2 : index
    %c0_211 = arith.constant 0 : index
    %473 = memref.load %arg8[%c2_210, %c0_211] : memref<6x4xf32, #tpu.memory_space<smem>>
    %474 = vector.broadcast %473 : f32 to vector<2x1x256xf32>
    %475 = arith.mulf %474, %418 : vector<2x1x256xf32>
    %c2_212 = arith.constant 2 : index
    %c1_213 = arith.constant 1 : index
    %476 = memref.load %arg8[%c2_212, %c1_213] : memref<6x4xf32, #tpu.memory_space<smem>>
    %477 = vector.broadcast %476 : f32 to vector<2x1x256xf32>
    %478 = arith.mulf %477, %422 : vector<2x1x256xf32>
    %479 = arith.addf %475, %478 : vector<2x1x256xf32>
    %c2_214 = arith.constant 2 : index
    %c2_215 = arith.constant 2 : index
    %480 = memref.load %arg8[%c2_214, %c2_215] : memref<6x4xf32, #tpu.memory_space<smem>>
    %481 = vector.broadcast %480 : f32 to vector<2x1x256xf32>
    %482 = arith.mulf %481, %426 : vector<2x1x256xf32>
    %483 = arith.addf %479, %482 : vector<2x1x256xf32>
    %c2_216 = arith.constant 2 : index
    %c3_217 = arith.constant 3 : index
    %484 = memref.load %arg8[%c2_216, %c3_217] : memref<6x4xf32, #tpu.memory_space<smem>>
    %485 = vector.broadcast %484 : f32 to vector<2x1x256xf32>
    %486 = arith.mulf %485, %430 : vector<2x1x256xf32>
    %487 = arith.addf %483, %486 : vector<2x1x256xf32>
    %488 = arith.negf %487 : vector<2x1x256xf32>
    %489 = math.exp %488 : vector<2x1x256xf32>
    %cst_218 = arith.constant 1.000000e+00 : f32
    %490 = vector.broadcast %cst_218 : f32 to vector<2x1x256xf32>
    %491 = arith.addf %490, %489 : vector<2x1x256xf32>
    %492 = arith.divf %490, %491 : vector<2x1x256xf32>
    %c0_219 = arith.constant 0 : index
    %c2_220 = arith.constant 2 : index
    %c0_221 = arith.constant 0 : index
    %493 = vector.load %arg9[%c0_219, %c2_220, %c0_221] : memref<2x6x256xf32, #tpu.memory_space<vmem>>, vector<2x1x256xf32>
    tpu.vector_store %arg9[%c0_219, %c2_220, %c0_221], %492 {strides = array<i32>} : memref<2x6x256xf32, #tpu.memory_space<vmem>>, vector<2x1x256xf32>,
    %c3_222 = arith.constant 3 : index
    %c0_223 = arith.constant 0 : index
    %494 = memref.load %arg8[%c3_222, %c0_223] : memref<6x4xf32, #tpu.memory_space<smem>>
    %495 = vector.broadcast %494 : f32 to vector<2x1x256xf32>
    %496 = arith.mulf %495, %418 : vector<2x1x256xf32>
    %c3_224 = arith.constant 3 : index
    %c1_225 = arith.constant 1 : index
    %497 = memref.load %arg8[%c3_224, %c1_225] : memref<6x4xf32, #tpu.memory_space<smem>>
    %498 = vector.broadcast %497 : f32 to vector<2x1x256xf32>
    %499 = arith.mulf %498, %422 : vector<2x1x256xf32>
    %500 = arith.addf %496, %499 : vector<2x1x256xf32>
    %c3_226 = arith.constant 3 : index
    %c2_227 = arith.constant 2 : index
    %501 = memref.load %arg8[%c3_226, %c2_227] : memref<6x4xf32, #tpu.memory_space<smem>>
    %502 = vector.broadcast %501 : f32 to vector<2x1x256xf32>
    %503 = arith.mulf %502, %426 : vector<2x1x256xf32>
    %504 = arith.addf %500, %503 : vector<2x1x256xf32>
    %c3_228 = arith.constant 3 : index
    %c3_229 = arith.constant 3 : index
    %505 = memref.load %arg8[%c3_228, %c3_229] : memref<6x4xf32, #tpu.memory_space<smem>>
    %506 = vector.broadcast %505 : f32 to vector<2x1x256xf32>
    %507 = arith.mulf %506, %430 : vector<2x1x256xf32>
    %508 = arith.addf %504, %507 : vector<2x1x256xf32>
    %509 = arith.negf %508 : vector<2x1x256xf32>
    %510 = math.exp %509 : vector<2x1x256xf32>
    %cst_230 = arith.constant 1.000000e+00 : f32
    %511 = vector.broadcast %cst_230 : f32 to vector<2x1x256xf32>
    %512 = arith.addf %511, %510 : vector<2x1x256xf32>
    %513 = arith.divf %511, %512 : vector<2x1x256xf32>
    %c0_231 = arith.constant 0 : index
    %c3_232 = arith.constant 3 : index
    %c0_233 = arith.constant 0 : index
    %514 = vector.load %arg9[%c0_231, %c3_232, %c0_233] : memref<2x6x256xf32, #tpu.memory_space<vmem>>, vector<2x1x256xf32>
    tpu.vector_store %arg9[%c0_231, %c3_232, %c0_233], %513 {strides = array<i32>} : memref<2x6x256xf32, #tpu.memory_space<vmem>>, vector<2x1x256xf32>,
    %c4_234 = arith.constant 4 : index
    %c0_235 = arith.constant 0 : index
    %515 = memref.load %arg8[%c4_234, %c0_235] : memref<6x4xf32, #tpu.memory_space<smem>>
    %516 = vector.broadcast %515 : f32 to vector<2x1x256xf32>
    %517 = arith.mulf %516, %418 : vector<2x1x256xf32>
    %c4_236 = arith.constant 4 : index
    %c1_237 = arith.constant 1 : index
    %518 = memref.load %arg8[%c4_236, %c1_237] : memref<6x4xf32, #tpu.memory_space<smem>>
    %519 = vector.broadcast %518 : f32 to vector<2x1x256xf32>
    %520 = arith.mulf %519, %422 : vector<2x1x256xf32>
    %521 = arith.addf %517, %520 : vector<2x1x256xf32>
    %c4_238 = arith.constant 4 : index
    %c2_239 = arith.constant 2 : index
    %522 = memref.load %arg8[%c4_238, %c2_239] : memref<6x4xf32, #tpu.memory_space<smem>>
    %523 = vector.broadcast %522 : f32 to vector<2x1x256xf32>
    %524 = arith.mulf %523, %426 : vector<2x1x256xf32>
    %525 = arith.addf %521, %524 : vector<2x1x256xf32>
    %c4_240 = arith.constant 4 : index
    %c3_241 = arith.constant 3 : index
    %526 = memref.load %arg8[%c4_240, %c3_241] : memref<6x4xf32, #tpu.memory_space<smem>>
    %527 = vector.broadcast %526 : f32 to vector<2x1x256xf32>
    %528 = arith.mulf %527, %430 : vector<2x1x256xf32>
    %529 = arith.addf %525, %528 : vector<2x1x256xf32>
    %530 = arith.negf %529 : vector<2x1x256xf32>
    %531 = math.exp %530 : vector<2x1x256xf32>
    %cst_242 = arith.constant 1.000000e+00 : f32
    %532 = vector.broadcast %cst_242 : f32 to vector<2x1x256xf32>
    %533 = arith.addf %532, %531 : vector<2x1x256xf32>
    %534 = arith.divf %532, %533 : vector<2x1x256xf32>
    %c0_243 = arith.constant 0 : index
    %c4_244 = arith.constant 4 : index
    %c0_245 = arith.constant 0 : index
    %535 = vector.load %arg9[%c0_243, %c4_244, %c0_245] : memref<2x6x256xf32, #tpu.memory_space<vmem>>, vector<2x1x256xf32>
    tpu.vector_store %arg9[%c0_243, %c4_244, %c0_245], %534 {strides = array<i32>} : memref<2x6x256xf32, #tpu.memory_space<vmem>>, vector<2x1x256xf32>,
    %c5_246 = arith.constant 5 : index
    %c0_247 = arith.constant 0 : index
    %536 = memref.load %arg8[%c5_246, %c0_247] : memref<6x4xf32, #tpu.memory_space<smem>>
    %537 = vector.broadcast %536 : f32 to vector<2x1x256xf32>
    %538 = arith.mulf %537, %418 : vector<2x1x256xf32>
    %c5_248 = arith.constant 5 : index
    %c1_249 = arith.constant 1 : index
    %539 = memref.load %arg8[%c5_248, %c1_249] : memref<6x4xf32, #tpu.memory_space<smem>>
    %540 = vector.broadcast %539 : f32 to vector<2x1x256xf32>
    %541 = arith.mulf %540, %422 : vector<2x1x256xf32>
    %542 = arith.addf %538, %541 : vector<2x1x256xf32>
    %c5_250 = arith.constant 5 : index
    %c2_251 = arith.constant 2 : index
    %543 = memref.load %arg8[%c5_250, %c2_251] : memref<6x4xf32, #tpu.memory_space<smem>>
    %544 = vector.broadcast %543 : f32 to vector<2x1x256xf32>
    %545 = arith.mulf %544, %426 : vector<2x1x256xf32>
    %546 = arith.addf %542, %545 : vector<2x1x256xf32>
    %c5_252 = arith.constant 5 : index
    %c3_253 = arith.constant 3 : index
    %547 = memref.load %arg8[%c5_252, %c3_253] : memref<6x4xf32, #tpu.memory_space<smem>>
    %548 = vector.broadcast %547 : f32 to vector<2x1x256xf32>
    %549 = arith.mulf %548, %430 : vector<2x1x256xf32>
    %550 = arith.addf %546, %549 : vector<2x1x256xf32>
    %551 = arith.negf %550 : vector<2x1x256xf32>
    %552 = math.exp %551 : vector<2x1x256xf32>
    %cst_254 = arith.constant 1.000000e+00 : f32
    %553 = vector.broadcast %cst_254 : f32 to vector<2x1x256xf32>
    %554 = arith.addf %553, %552 : vector<2x1x256xf32>
    %555 = arith.divf %553, %554 : vector<2x1x256xf32>
    %c0_255 = arith.constant 0 : index
    %c5_256 = arith.constant 5 : index
    %c0_257 = arith.constant 0 : index
    %556 = vector.load %arg9[%c0_255, %c5_256, %c0_257] : memref<2x6x256xf32, #tpu.memory_space<vmem>>, vector<2x1x256xf32>
    tpu.vector_store %arg9[%c0_255, %c5_256, %c0_257], %555 {strides = array<i32>} : memref<2x6x256xf32, #tpu.memory_space<vmem>>, vector<2x1x256xf32>,
    return
  }
  func.func @transform_0(%arg0: i32) -> (i32, i32, i32) {
    %c0_i32 = arith.constant 0 : i32
    %c0_i32_0 = arith.constant 0 : i32
    %c0_i32_1 = arith.constant 0 : i32
    return %arg0, %c0_i32, %c0_i32_0 : i32, i32, i32
  }
  func.func @transform_1(%arg0: i32) -> (i32, i32, i32) {
    %c0_i32 = arith.constant 0 : i32
    %c0_i32_0 = arith.constant 0 : i32
    %c0_i32_1 = arith.constant 0 : i32
    %c0_i32_2 = arith.constant 0 : i32
    return %c0_i32, %c0_i32_0, %c0_i32_1 : i32, i32, i32
  }
  func.func @transform_2(%arg0: i32) -> (i32, i32, i32) {
    %c0_i32 = arith.constant 0 : i32
    %c0_i32_0 = arith.constant 0 : i32
    %c0_i32_1 = arith.constant 0 : i32
    %c0_i32_2 = arith.constant 0 : i32
    return %c0_i32, %c0_i32_0, %c0_i32_1 : i32, i32, i32
  }
  func.func @transform_3(%arg0: i32) -> (i32, i32) {
    %c0_i32 = arith.constant 0 : i32
    %c0_i32_0 = arith.constant 0 : i32
    %c0_i32_1 = arith.constant 0 : i32
    return %c0_i32, %c0_i32_0 : i32, i32
  }
  func.func @transform_4(%arg0: i32) -> (i32, i32) {
    %c0_i32 = arith.constant 0 : i32
    %c0_i32_0 = arith.constant 0 : i32
    %c0_i32_1 = arith.constant 0 : i32
    return %c0_i32, %c0_i32_0 : i32, i32
  }
  func.func @transform_5(%arg0: i32) -> (i32, i32) {
    %c0_i32 = arith.constant 0 : i32
    %c0_i32_0 = arith.constant 0 : i32
    %c0_i32_1 = arith.constant 0 : i32
    return %c0_i32, %c0_i32_0 : i32, i32
  }
  func.func @transform_6(%arg0: i32) -> (i32, i32) {
    %c0_i32 = arith.constant 0 : i32
    %c0_i32_0 = arith.constant 0 : i32
    %c0_i32_1 = arith.constant 0 : i32
    return %c0_i32, %c0_i32_0 : i32, i32
  }
  func.func @transform_7(%arg0: i32) -> (i32, i32) {
    %c0_i32 = arith.constant 0 : i32
    %c0_i32_0 = arith.constant 0 : i32
    %c0_i32_1 = arith.constant 0 : i32
    return %c0_i32, %c0_i32_0 : i32, i32
  }
  func.func @transform_8(%arg0: i32) -> (i32, i32, i32) {
    %c0_i32 = arith.constant 0 : i32
    %c0_i32_0 = arith.constant 0 : i32
    %c0_i32_1 = arith.constant 0 : i32
    return %arg0, %c0_i32, %c0_i32_0 : i32, i32, i32
  }
}

</mosaic_0001>

<llo_original>
// kernel: tpu_custom_call.1
$region0: #{tpu_custom_call.1}
  #allocation0 [shape = 'u32[]', space=smem, size = 0x4, offset = 0x4, fixed_abs, tag = 'smem constant byte address 0x4 - core index']
  #allocation1 [shape = 'u32[144,128]{1,0:T(1,128)}', space=vmem, size = 0x12000, scoped, tag = 'internal scratch']
  #allocation2 [shape = 'f32[1,1]{1,0:T(1,128)S(6)}', space=smem, size = 0x200, scoped, tag = 'scoped memory for tpu_custom_call.1']
  %s0 = inlined_call_operand.vmem [shape: f32[2,4,256], index: 0, kind: input, shape index: {}]
  %s1 = inlined_call_operand.hbm [shape: s32[1,1,256], index: 1, kind: input, shape index: {}]
  %s2 = inlined_call_operand.hbm [shape: s32[1,1,256], index: 2, kind: input, shape index: {}]
  %s3 = inlined_call_operand.vmem [shape: f32[8,4], index: 3, kind: input, shape index: {}]
  %s4 = inlined_call_operand.vmem [shape: f32[4,8], index: 4, kind: input, shape index: {}]
  %s5 = inlined_call_operand.vmem [shape: f32[3,3], index: 5, kind: input, shape index: {}]
  %s6 = inlined_call_operand.<no memory space> [shape: f32[1,1], index: 6, kind: input, shape index: {}]
  %s7 = inlined_call_operand.vmem [shape: f32[6,4], index: 7, kind: input, shape index: {}]
  %s8 = inlined_call_operand.vmem [shape: f32[2,6,256], index: 8, kind: output, shape index: {}]
  %s9 = sld [smem:[#allocation0]]
  $region66: #{tpu_custom_call.1} parent=0
    _
  %s11 = ssub.s32 1, %s9
  %s12 = scalar_select 0, %s11, %s9
  %13 = sst [smem:[#allocation2]] %s6
  $region1: #{tpu_custom_call.1} parent=0
    #allocation3 [shape = 'u8[1024]{0}', space=vmem, size = 0x400, scoped, tag = 'input window, operand 1, single buffered']
    #allocation4 [shape = 's32[1]{0}', space=sflag, size = 0x4, scoped, tag = 'scoped memory for tpu_custom_call.1']
    #allocation5 [shape = 's32[1]{0}', space=sflag, size = 0x4, scoped, tag = 'scoped memory for tpu_custom_call.1']
    #allocation6 [shape = 'u8[1024]{0}', space=vmem, size = 0x400, scoped, tag = 'input window, operand 2, single buffered']
    #allocation7 [shape = 's32[1]{0}', space=sflag, size = 0x4, scoped, tag = 'scoped memory for tpu_custom_call.1']
    #allocation8 [shape = 'u8[4096]{0}', space=smem, size = 0x1000, scoped, tag = 'input window, operand 3, single buffered']
    #allocation9 [shape = 'u8[2048]{0}', space=smem, size = 0x800, scoped, tag = 'input window, operand 4, single buffered']
    #allocation10 [shape = 's32[1]{0}', space=sflag, size = 0x4, scoped, tag = 'scoped memory for tpu_custom_call.1']
    #allocation11 [shape = 'u8[2048]{0}', space=smem, size = 0x800, scoped, tag = 'input window, operand 5, single buffered']
    #allocation12 [shape = 'u8[4096]{0}', space=smem, size = 0x1000, scoped, tag = 'input window, operand 7, single buffered']
    #allocation13 [shape = 's32[1]{0}', space=sflag, size = 0x4, scoped, tag = 'scoped memory for tpu_custom_call.1']
    %14 = vsyncpa [#allocation4], 0
    %15 = vsyncpa [#allocation7], 0
    %16 = vsyncpa [#allocation5], 0
    %17 = vsyncpa [#allocation10], 0
    %18 = vsyncpa [#allocation13], 0
    // Predicated region
    $region2: #{tpu_custom_call.1} parent=1 // pred_check
      _
    $region3: #{tpu_custom_call.1} parent=1 // pred_check_branch
      %20 = sbr.rel (0) target = $region5
    $region4: #{tpu_custom_call.1} parent=1 // pred_region
      _
    $region5: #{tpu_custom_call.1} parent=1 // pred_fallthru
      _
    // Predicated region
    $region6: #{tpu_custom_call.1} parent=1 // pred_check
      _
    $region7: #{tpu_custom_call.1} parent=1 // pred_check_branch
      %22 = sbr.rel (0) target = $region9
    $region8: #{tpu_custom_call.1} parent=1 // pred_region
      %s24 = ssub.s32 32, 32
      %25 = vsyncadd [#allocation4], %s24
      %s27 = sshll.u32 [#allocation3], 4
      %s28 = int_to_ptr.vmem [resolvable:$true] %s27
      %30 = dma.hbm_to_vmem [thread:$0]  %s1, 32, %s28, [#allocation4]
    $region9: #{tpu_custom_call.1} parent=1 // pred_fallthru
      _
    // Predicated region
    $region10: #{tpu_custom_call.1} parent=1 // pred_check
      _
    $region11: #{tpu_custom_call.1} parent=1 // pred_check_branch
      %32 = sbr.rel (0) target = $region13
    $region12: #{tpu_custom_call.1} parent=1 // pred_region
      %s34 = ssub.s32 32, 32
      %35 = vsyncadd [#allocation7], %s34
      %s37 = sshll.u32 [#allocation6], 4
      %s38 = int_to_ptr.vmem [resolvable:$true] %s37
      %40 = dma.hbm_to_vmem [thread:$0]  %s2, 32, %s38, [#allocation7]
    $region13: #{tpu_custom_call.1} parent=1 // pred_fallthru
      _
    // Predicated region
    $region14: #{tpu_custom_call.1} parent=1 // pred_check
      _
    $region15: #{tpu_custom_call.1} parent=1 // pred_check_branch
      %42 = sbr.rel (0) target = $region17
    $region16: #{tpu_custom_call.1} parent=1 // pred_region
      %s44 = ssub.s32 128, 128
      %45 = vsyncadd [#allocation5], %s44
      %s47 = sshll.u32 %s3, 4
      %s48 = int_to_ptr.vmem [resolvable:$true] %s47
      %50 = dma.vmem_to_smem %s48, 128, [#allocation8], [#allocation5]
    $region17: #{tpu_custom_call.1} parent=1 // pred_fallthru
      _
    // Predicated region
    $region18: #{tpu_custom_call.1} parent=1 // pred_check
      _
    $region19: #{tpu_custom_call.1} parent=1 // pred_check_branch
      %52 = sbr.rel (0) target = $region21
    $region20: #{tpu_custom_call.1} parent=1 // pred_region
      %s54 = ssub.s32 64, 64
      %55 = vsyncadd [#allocation10], %s54
      %s57 = sshll.u32 %s4, 4
      %s58 = int_to_ptr.vmem [resolvable:$true] %s57
      %60 = dma.vmem_to_smem %s58, 64, [#allocation9], [#allocation10]
    $region21: #{tpu_custom_call.1} parent=1 // pred_fallthru
      _
    // Predicated region
    $region22: #{tpu_custom_call.1} parent=1 // pred_check
      _
    $region23: #{tpu_custom_call.1} parent=1 // pred_check_branch
      %62 = sbr.rel (0) target = $region25
    $region24: #{tpu_custom_call.1} parent=1 // pred_region
      %s64 = ssub.s32 64, 64
      %65 = vsyncadd [#allocation10], %s64
      %s67 = sshll.u32 %s5, 4
      %s68 = int_to_ptr.vmem [resolvable:$true] %s67
      %70 = dma.vmem_to_smem %s68, 64, [#allocation11], [#allocation10]
    $region25: #{tpu_custom_call.1} parent=1 // pred_fallthru
      _
    // Predicated region
    $region26: #{tpu_custom_call.1} parent=1 // pred_check
      _
    $region27: #{tpu_custom_call.1} parent=1 // pred_check_branch
      %72 = sbr.rel (0) target = $region29
    $region28: #{tpu_custom_call.1} parent=1 // pred_region
      _
    $region29: #{tpu_custom_call.1} parent=1 // pred_fallthru
      _
    // Predicated region
    $region30: #{tpu_custom_call.1} parent=1 // pred_check
      _
    $region31: #{tpu_custom_call.1} parent=1 // pred_check_branch
      %74 = sbr.rel (0) target = $region33
    $region32: #{tpu_custom_call.1} parent=1 // pred_region
      %s76 = ssub.s32 128, 128
      %77 = vsyncadd [#allocation13], %s76
      %s79 = sshll.u32 %s7, 4
      %s80 = int_to_ptr.vmem [resolvable:$true] %s79
      %82 = dma.vmem_to_smem %s80, 128, [#allocation12], [#allocation13]
    $region33: #{tpu_custom_call.1} parent=1 // pred_fallthru
      _
    // Predicated region
    $region34: #{tpu_custom_call.1} parent=1 // pred_check
      _
    $region35: #{tpu_custom_call.1} parent=1 // pred_check_branch
      %84 = sbr.rel (0) target = $region37
    $region36: #{tpu_custom_call.1} parent=1 // pred_region
      %85 = dma.done [#allocation4], 32
    $region37: #{tpu_custom_call.1} parent=1 // pred_fallthru
      _
    // Predicated region
    $region38: #{tpu_custom_call.1} parent=1 // pred_check
      _
    $region39: #{tpu_custom_call.1} parent=1 // pred_check_branch
      %87 = sbr.rel (0) target = $region41
    $region40: #{tpu_custom_call.1} parent=1 // pred_region
      %88 = dma.done [#allocation7], 32
    $region41: #{tpu_custom_call.1} parent=1 // pred_fallthru
      _
    // Predicated region
    $region42: #{tpu_custom_call.1} parent=1 // pred_check
      _
    $region43: #{tpu_custom_call.1} parent=1 // pred_check_branch
      %90 = sbr.rel (0) target = $region45
    $region44: #{tpu_custom_call.1} parent=1 // pred_region
      %91 = dma.done [#allocation5], 128
    $region45: #{tpu_custom_call.1} parent=1 // pred_fallthru
      _
    // Predicated region
    $region46: #{tpu_custom_call.1} parent=1 // pred_check
      _
    $region47: #{tpu_custom_call.1} parent=1 // pred_check_branch
      %93 = sbr.rel (0) target = $region49
    $region48: #{tpu_custom_call.1} parent=1 // pred_region
      %94 = dma.done [#allocation10], 64
    $region49: #{tpu_custom_call.1} parent=1 // pred_fallthru
      _
    // Predicated region
    $region50: #{tpu_custom_call.1} parent=1 // pred_check
      _
    $region51: #{tpu_custom_call.1} parent=1 // pred_check_branch
      %96 = sbr.rel (0) target = $region53
    $region52: #{tpu_custom_call.1} parent=1 // pred_region
      %97 = dma.done [#allocation10], 64
    $region53: #{tpu_custom_call.1} parent=1 // pred_fallthru
      _
    // Predicated region
    $region54: #{tpu_custom_call.1} parent=1 // pred_check
      _
    $region55: #{tpu_custom_call.1} parent=1 // pred_check_branch
      %99 = sbr.rel (0) target = $region57
    $region56: #{tpu_custom_call.1} parent=1 // pred_region
      %100 = dma.done [#allocation13], 128
    $region57: #{tpu_custom_call.1} parent=1 // pred_fallthru
      _
    %101 = sfence
    %v102 = vld [vmem:[%s0] sm:$0xff]
    %v103 = vld [vmem:[%s0 + $0x8] sm:$0xff]
    %v104 = vld [vmem:[#allocation3] sm:$0x3]
    %v105 = vld [vmem:[#allocation6] sm:$0x3]
    %v108 = vcombine.high %v102, %v102
    %v109 = vcombine.high %v103, %v103
    %vm112 = vcmask 1043456
    %v113 = vsel %vm112, %v102, 0.0
    %v114 = vsel %vm112, %v108, 0.0
    %v115 = vadd.f32 %v113, %v114
    %116 = vadd.xlane.f32.xlu0 %v115
    %v117 = vpop.xlane.xlu0 %116
    %v118 = vsel %vm112, %v103, 0.0
    %v119 = vsel %vm112, %v109, 0.0
    %v120 = vadd.f32 %v118, %v119
    %121 = vadd.xlane.f32.xlu0 %v120
    %v122 = vpop.xlane.xlu0 %121
    %v123 = vrcp.pop 256.0
    %v124 = vmul.f32 %v117, %v123
    %v125 = vmul.f32 %v122, %v123
    %s126 = sld [smem:[#allocation8]]
    %v127 = vstv %s126
    %v128 = vmul.f32 %v127, %v124
    %v129 = vmul.f32 %v127, %v125
    %s130 = sld [smem:[#allocation8 + $0x1]]
    %v131 = vstv %s130
    %v132 = vmul.f32 %v131, %v124
    %v133 = vmul.f32 %v131, %v125
    %v136 = vrot.slane %v132, 1
    %v137 = vrot.slane %v133, 1
    %v140 = vadd.f32 %v128, %v136
    %v141 = vadd.f32 %v129, %v137
    %s142 = sld [smem:[#allocation8 + $0x2]]
    %v143 = vstv %s142
    %v144 = vmul.f32 %v143, %v124
    %v145 = vmul.f32 %v143, %v125
    %v148 = vrot.slane %v144, 2
    %v149 = vrot.slane %v145, 2
    %v152 = vadd.f32 %v140, %v148
    %v153 = vadd.f32 %v141, %v149
    %s154 = sld [smem:[#allocation8 + $0x3]]
    %v155 = vstv %s154
    %v156 = vmul.f32 %v155, %v124
    %v157 = vmul.f32 %v155, %v125
    %v160 = vrot.slane %v156, 3
    %v161 = vrot.slane %v157, 3
    %v164 = vadd.f32 %v152, %v160
    %v165 = vadd.f32 %v153, %v161
    %v166 = vmax.f32 %v164, 0.0
    %v167 = vmax.f32 %v165, 0.0
    %s168 = sld [smem:[#allocation8 + $0x80]]
    %v169 = vstv %s168
    %v170 = vmul.f32 %v169, %v124
    %v171 = vmul.f32 %v169, %v125
    %s172 = sld [smem:[#allocation8 + $0x81]]
    %v173 = vstv %s172
    %v174 = vmul.f32 %v173, %v124
    %v175 = vmul.f32 %v173, %v125
    %v178 = vrot.slane %v174, 1
    %v179 = vrot.slane %v175, 1
    %v182 = vadd.f32 %v170, %v178
    %v183 = vadd.f32 %v171, %v179
    %s184 = sld [smem:[#allocation8 + $0x82]]
    %v185 = vstv %s184
    %v186 = vmul.f32 %v185, %v124
    %v187 = vmul.f32 %v185, %v125
    %v190 = vrot.slane %v186, 2
    %v191 = vrot.slane %v187, 2
    %v194 = vadd.f32 %v182, %v190
    %v195 = vadd.f32 %v183, %v191
    %s196 = sld [smem:[#allocation8 + $0x83]]
    %v197 = vstv %s196
    %v198 = vmul.f32 %v197, %v124
    %v199 = vmul.f32 %v197, %v125
    %v202 = vrot.slane %v198, 3
    %v203 = vrot.slane %v199, 3
    %v206 = vadd.f32 %v194, %v202
    %v207 = vadd.f32 %v195, %v203
    %v208 = vmax.f32 %v206, 0.0
    %v209 = vmax.f32 %v207, 0.0
    %s210 = sld [smem:[#allocation8 + $0x100]]
    %v211 = vstv %s210
    %v212 = vmul.f32 %v211, %v124
    %v213 = vmul.f32 %v211, %v125
    %s214 = sld [smem:[#allocation8 + $0x101]]
    %v215 = vstv %s214
    %v216 = vmul.f32 %v215, %v124
    %v217 = vmul.f32 %v215, %v125
    %v220 = vrot.slane %v216, 1
    %v221 = vrot.slane %v217, 1
    %v224 = vadd.f32 %v212, %v220
    %v225 = vadd.f32 %v213, %v221
    %s226 = sld [smem:[#allocation8 + $0x102]]
    %v227 = vstv %s226
    %v228 = vmul.f32 %v227, %v124
    %v229 = vmul.f32 %v227, %v125
    %v232 = vrot.slane %v228, 2
    %v233 = vrot.slane %v229, 2
    %v236 = vadd.f32 %v224, %v232
    %v237 = vadd.f32 %v225, %v233
    %s238 = sld [smem:[#allocation8 + $0x103]]
    %v239 = vstv %s238
    %v240 = vmul.f32 %v239, %v124
    %v241 = vmul.f32 %v239, %v125
    %v244 = vrot.slane %v240, 3
    %v245 = vrot.slane %v241, 3
    %v248 = vadd.f32 %v236, %v244
    %v249 = vadd.f32 %v237, %v245
    %v250 = vmax.f32 %v248, 0.0
    %v251 = vmax.f32 %v249, 0.0
    %s252 = sld [smem:[#allocation8 + $0x180]]
    %v253 = vstv %s252
    %v254 = vmul.f32 %v253, %v124
    %v255 = vmul.f32 %v253, %v125
    %s256 = sld [smem:[#allocation8 + $0x181]]
    %v257 = vstv %s256
    %v258 = vmul.f32 %v257, %v124
    %v259 = vmul.f32 %v257, %v125
    %v262 = vrot.slane %v258, 1
    %v263 = vrot.slane %v259, 1
    %v266 = vadd.f32 %v254, %v262
    %v267 = vadd.f32 %v255, %v263
    %s268 = sld [smem:[#allocation8 + $0x182]]
    %v269 = vstv %s268
    %v270 = vmul.f32 %v269, %v124
    %v271 = vmul.f32 %v269, %v125
    %v274 = vrot.slane %v270, 2
    %v275 = vrot.slane %v271, 2
    %v278 = vadd.f32 %v266, %v274
    %v279 = vadd.f32 %v267, %v275
    %s280 = sld [smem:[#allocation8 + $0x183]]
    %v281 = vstv %s280
    %v282 = vmul.f32 %v281, %v124
    %v283 = vmul.f32 %v281, %v125
    %v286 = vrot.slane %v282, 3
    %v287 = vrot.slane %v283, 3
    %v290 = vadd.f32 %v278, %v286
    %v291 = vadd.f32 %v279, %v287
    %v292 = vmax.f32 %v290, 0.0
    %v293 = vmax.f32 %v291, 0.0
    %s294 = sld [smem:[#allocation8 + $0x200]]
    %v295 = vstv %s294
    %v296 = vmul.f32 %v295, %v124
    %v297 = vmul.f32 %v295, %v125
    %s298 = sld [smem:[#allocation8 + $0x201]]
    %v299 = vstv %s298
    %v300 = vmul.f32 %v299, %v124
    %v301 = vmul.f32 %v299, %v125
    %v304 = vrot.slane %v300, 1
    %v305 = vrot.slane %v301, 1
    %v308 = vadd.f32 %v296, %v304
    %v309 = vadd.f32 %v297, %v305
    %s310 = sld [smem:[#allocation8 + $0x202]]
    %v311 = vstv %s310
    %v312 = vmul.f32 %v311, %v124
    %v313 = vmul.f32 %v311, %v125
    %v316 = vrot.slane %v312, 2
    %v317 = vrot.slane %v313, 2
    %v320 = vadd.f32 %v308, %v316
    %v321 = vadd.f32 %v309, %v317
    %s322 = sld [smem:[#allocation8 + $0x203]]
    %v323 = vstv %s322
    %v324 = vmul.f32 %v323, %v124
    %v325 = vmul.f32 %v323, %v125
    %v328 = vrot.slane %v324, 3
    %v329 = vrot.slane %v325, 3
    %v332 = vadd.f32 %v320, %v328
    %v333 = vadd.f32 %v321, %v329
    %v334 = vmax.f32 %v332, 0.0
    %v335 = vmax.f32 %v333, 0.0
    %s336 = sld [smem:[#allocation8 + $0x280]]
    %v337 = vstv %s336
    %v338 = vmul.f32 %v337, %v124
    %v339 = vmul.f32 %v337, %v125
    %s340 = sld [smem:[#allocation8 + $0x281]]
    %v341 = vstv %s340
    %v342 = vmul.f32 %v341, %v124
    %v343 = vmul.f32 %v341, %v125
    %v346 = vrot.slane %v342, 1
    %v347 = vrot.slane %v343, 1
    %v350 = vadd.f32 %v338, %v346
    %v351 = vadd.f32 %v339, %v347
    %s352 = sld [smem:[#allocation8 + $0x282]]
    %v353 = vstv %s352
    %v354 = vmul.f32 %v353, %v124
    %v355 = vmul.f32 %v353, %v125
    %v358 = vrot.slane %v354, 2
    %v359 = vrot.slane %v355, 2
    %v362 = vadd.f32 %v350, %v358
    %v363 = vadd.f32 %v351, %v359
    %s364 = sld [smem:[#allocation8 + $0x283]]
    %v365 = vstv %s364
    %v366 = vmul.f32 %v365, %v124
    %v367 = vmul.f32 %v365, %v125
    %v370 = vrot.slane %v366, 3
    %v371 = vrot.slane %v367, 3
    %v374 = vadd.f32 %v362, %v370
    %v375 = vadd.f32 %v363, %v371
    %v376 = vmax.f32 %v374, 0.0
    %v377 = vmax.f32 %v375, 0.0
    %s378 = sld [smem:[#allocation8 + $0x300]]
    %v379 = vstv %s378
    %v380 = vmul.f32 %v379, %v124
    %v381 = vmul.f32 %v379, %v125
    %s382 = sld [smem:[#allocation8 + $0x301]]
    %v383 = vstv %s382
    %v384 = vmul.f32 %v383, %v124
    %v385 = vmul.f32 %v383, %v125
    %v388 = vrot.slane %v384, 1
    %v389 = vrot.slane %v385, 1
    %v392 = vadd.f32 %v380, %v388
    %v393 = vadd.f32 %v381, %v389
    %s394 = sld [smem:[#allocation8 + $0x302]]
    %v395 = vstv %s394
    %v396 = vmul.f32 %v395, %v124
    %v397 = vmul.f32 %v395, %v125
    %v400 = vrot.slane %v396, 2
    %v401 = vrot.slane %v397, 2
    %v404 = vadd.f32 %v392, %v400
    %v405 = vadd.f32 %v393, %v401
    %s406 = sld [smem:[#allocation8 + $0x303]]
    %v407 = vstv %s406
    %v408 = vmul.f32 %v407, %v124
    %v409 = vmul.f32 %v407, %v125
    %v412 = vrot.slane %v408, 3
    %v413 = vrot.slane %v409, 3
    %v416 = vadd.f32 %v404, %v412
    %v417 = vadd.f32 %v405, %v413
    %v418 = vmax.f32 %v416, 0.0
    %v419 = vmax.f32 %v417, 0.0
    %s420 = sld [smem:[#allocation8 + $0x380]]
    %v421 = vstv %s420
    %v422 = vmul.f32 %v421, %v124
    %v423 = vmul.f32 %v421, %v125
    %s424 = sld [smem:[#allocation8 + $0x381]]
    %v425 = vstv %s424
    %v426 = vmul.f32 %v425, %v124
    %v427 = vmul.f32 %v425, %v125
    %v430 = vrot.slane %v426, 1
    %v431 = vrot.slane %v427, 1
    %v434 = vadd.f32 %v422, %v430
    %v435 = vadd.f32 %v423, %v431
    %s436 = sld [smem:[#allocation8 + $0x382]]
    %v437 = vstv %s436
    %v438 = vmul.f32 %v437, %v124
    %v439 = vmul.f32 %v437, %v125
    %v442 = vrot.slane %v438, 2
    %v443 = vrot.slane %v439, 2
    %v446 = vadd.f32 %v434, %v442
    %v447 = vadd.f32 %v435, %v443
    %s448 = sld [smem:[#allocation8 + $0x383]]
    %v449 = vstv %s448
    %v450 = vmul.f32 %v449, %v124
    %v451 = vmul.f32 %v449, %v125
    %v454 = vrot.slane %v450, 3
    %v455 = vrot.slane %v451, 3
    %v458 = vadd.f32 %v446, %v454
    %v459 = vadd.f32 %v447, %v455
    %v460 = vmax.f32 %v458, 0.0
    %v461 = vmax.f32 %v459, 0.0
    %s462 = sld [smem:[#allocation9]]
    %v463 = vstv %s462
    %v464 = vmul.f32 %v463, %v166
    %v465 = vmul.f32 %v463, %v167
    %s466 = sld [smem:[#allocation9 + $0x1]]
    %v467 = vstv %s466
    %v468 = vmul.f32 %v467, %v208
    %v469 = vmul.f32 %v467, %v209
    %v470 = vadd.f32 %v464, %v468
    %v471 = vadd.f32 %v465, %v469
    %s472 = sld [smem:[#allocation9 + $0x2]]
    %v473 = vstv %s472
    %v474 = vmul.f32 %v473, %v250
    %v475 = vmul.f32 %v473, %v251
    %v476 = vadd.f32 %v470, %v474
    %v477 = vadd.f32 %v471, %v475
    %s478 = sld [smem:[#allocation9 + $0x3]]
    %v479 = vstv %s478
    %v480 = vmul.f32 %v479, %v292
    %v481 = vmul.f32 %v479, %v293
    %v482 = vadd.f32 %v476, %v480
    %v483 = vadd.f32 %v477, %v481
    %s484 = sld [smem:[#allocation9 + $0x4]]
    %v485 = vstv %s484
    %v486 = vmul.f32 %v485, %v334
    %v487 = vmul.f32 %v485, %v335
    %v488 = vadd.f32 %v482, %v486
    %v489 = vadd.f32 %v483, %v487
    %s490 = sld [smem:[#allocation9 + $0x5]]
    %v491 = vstv %s490
    %v492 = vmul.f32 %v491, %v376
    %v493 = vmul.f32 %v491, %v377
    %v494 = vadd.f32 %v488, %v492
    %v495 = vadd.f32 %v489, %v493
    %s496 = sld [smem:[#allocation9 + $0x6]]
    %v497 = vstv %s496
    %v498 = vmul.f32 %v497, %v418
    %v499 = vmul.f32 %v497, %v419
    %v500 = vadd.f32 %v494, %v498
    %v501 = vadd.f32 %v495, %v499
    %s502 = sld [smem:[#allocation9 + $0x7]]
    %v503 = vstv %s502
    %v504 = vmul.f32 %v503, %v460
    %v505 = vmul.f32 %v503, %v461
    %v506 = vadd.f32 %v500, %v504
    %v507 = vadd.f32 %v501, %v505
    %v508 = vxor.u32 %v506, 2147483648
    %v509 = vxor.u32 %v507, 2147483648
    %v510 = vmul.f32 %v508, 1.442695
    %v511 = vpow.pop %v510
    %v512 = vmul.f32 %v509, 1.442695
    %v513 = vpow.pop %v512
    %v514 = vadd.f32 %v511, 1.0
    %v515 = vadd.f32 %v513, 1.0
    %v516 = vrcp.pop %v514
    %v517 = vmul.f32 1.0, %v516
    %v518 = vrcp.pop %v515
    %v519 = vmul.f32 1.0, %v518
    %s520 = sld [smem:[#allocation9 + $0x80]]
    %v521 = vstv %s520
    %v522 = vmul.f32 %v521, %v166
    %v523 = vmul.f32 %v521, %v167
    %s524 = sld [smem:[#allocation9 + $0x81]]
    %v525 = vstv %s524
    %v526 = vmul.f32 %v525, %v208
    %v527 = vmul.f32 %v525, %v209
    %v528 = vadd.f32 %v522, %v526
    %v529 = vadd.f32 %v523, %v527
    %s530 = sld [smem:[#allocation9 + $0x82]]
    %v531 = vstv %s530
    %v532 = vmul.f32 %v531, %v250
    %v533 = vmul.f32 %v531, %v251
    %v534 = vadd.f32 %v528, %v532
    %v535 = vadd.f32 %v529, %v533
    %s536 = sld [smem:[#allocation9 + $0x83]]
    %v537 = vstv %s536
    %v538 = vmul.f32 %v537, %v292
    %v539 = vmul.f32 %v537, %v293
    %v540 = vadd.f32 %v534, %v538
    %v541 = vadd.f32 %v535, %v539
    %s542 = sld [smem:[#allocation9 + $0x84]]
    %v543 = vstv %s542
    %v544 = vmul.f32 %v543, %v334
    %v545 = vmul.f32 %v543, %v335
    %v546 = vadd.f32 %v540, %v544
    %v547 = vadd.f32 %v541, %v545
    %s548 = sld [smem:[#allocation9 + $0x85]]
    %v549 = vstv %s548
    %v550 = vmul.f32 %v549, %v376
    %v551 = vmul.f32 %v549, %v377
    %v552 = vadd.f32 %v546, %v550
    %v553 = vadd.f32 %v547, %v551
    %s554 = sld [smem:[#allocation9 + $0x86]]
    %v555 = vstv %s554
    %v556 = vmul.f32 %v555, %v418
    %v557 = vmul.f32 %v555, %v419
    %v558 = vadd.f32 %v552, %v556
    %v559 = vadd.f32 %v553, %v557
    %s560 = sld [smem:[#allocation9 + $0x87]]
    %v561 = vstv %s560
    %v562 = vmul.f32 %v561, %v460
    %v563 = vmul.f32 %v561, %v461
    %v564 = vadd.f32 %v558, %v562
    %v565 = vadd.f32 %v559, %v563
    %v566 = vxor.u32 %v564, 2147483648
    %v567 = vxor.u32 %v565, 2147483648
    %v568 = vmul.f32 %v566, 1.442695
    %v569 = vpow.pop %v568
    %v570 = vmul.f32 %v567, 1.442695
    %v571 = vpow.pop %v570
    %v572 = vadd.f32 %v569, 1.0
    %v573 = vadd.f32 %v571, 1.0
    %v574 = vrcp.pop %v572
    %v575 = vmul.f32 1.0, %v574
    %v576 = vrcp.pop %v573
    %v577 = vmul.f32 1.0, %v576
    %s578 = sld [smem:[#allocation9 + $0x100]]
    %v579 = vstv %s578
    %v580 = vmul.f32 %v579, %v166
    %v581 = vmul.f32 %v579, %v167
    %s582 = sld [smem:[#allocation9 + $0x101]]
    %v583 = vstv %s582
    %v584 = vmul.f32 %v583, %v208
    %v585 = vmul.f32 %v583, %v209
    %v586 = vadd.f32 %v580, %v584
    %v587 = vadd.f32 %v581, %v585
    %s588 = sld [smem:[#allocation9 + $0x102]]
    %v589 = vstv %s588
    %v590 = vmul.f32 %v589, %v250
    %v591 = vmul.f32 %v589, %v251
    %v592 = vadd.f32 %v586, %v590
    %v593 = vadd.f32 %v587, %v591
    %s594 = sld [smem:[#allocation9 + $0x103]]
    %v595 = vstv %s594
    %v596 = vmul.f32 %v595, %v292
    %v597 = vmul.f32 %v595, %v293
    %v598 = vadd.f32 %v592, %v596
    %v599 = vadd.f32 %v593, %v597
    %s600 = sld [smem:[#allocation9 + $0x104]]
    %v601 = vstv %s600
    %v602 = vmul.f32 %v601, %v334
    %v603 = vmul.f32 %v601, %v335
    %v604 = vadd.f32 %v598, %v602
    %v605 = vadd.f32 %v599, %v603
    %s606 = sld [smem:[#allocation9 + $0x105]]
    %v607 = vstv %s606
    %v608 = vmul.f32 %v607, %v376
    %v609 = vmul.f32 %v607, %v377
    %v610 = vadd.f32 %v604, %v608
    %v611 = vadd.f32 %v605, %v609
    %s612 = sld [smem:[#allocation9 + $0x106]]
    %v613 = vstv %s612
    %v614 = vmul.f32 %v613, %v418
    %v615 = vmul.f32 %v613, %v419
    %v616 = vadd.f32 %v610, %v614
    %v617 = vadd.f32 %v611, %v615
    %s618 = sld [smem:[#allocation9 + $0x107]]
    %v619 = vstv %s618
    %v620 = vmul.f32 %v619, %v460
    %v621 = vmul.f32 %v619, %v461
    %v622 = vadd.f32 %v616, %v620
    %v623 = vadd.f32 %v617, %v621
    %v624 = vxor.u32 %v622, 2147483648
    %v625 = vxor.u32 %v623, 2147483648
    %v626 = vmul.f32 %v624, 1.442695
    %v627 = vpow.pop %v626
    %v628 = vmul.f32 %v625, 1.442695
    %v629 = vpow.pop %v628
    %v630 = vadd.f32 %v627, 1.0
    %v631 = vadd.f32 %v629, 1.0
    %v632 = vrcp.pop %v630
    %v633 = vmul.f32 1.0, %v632
    %v634 = vrcp.pop %v631
    %v635 = vmul.f32 1.0, %v634
    %s636 = sld [smem:[#allocation9 + $0x180]]
    %v637 = vstv %s636
    %v638 = vmul.f32 %v637, %v166
    %v639 = vmul.f32 %v637, %v167
    %s640 = sld [smem:[#allocation9 + $0x181]]
    %v641 = vstv %s640
    %v642 = vmul.f32 %v641, %v208
    %v643 = vmul.f32 %v641, %v209
    %v644 = vadd.f32 %v638, %v642
    %v645 = vadd.f32 %v639, %v643
    %s646 = sld [smem:[#allocation9 + $0x182]]
    %v647 = vstv %s646
    %v648 = vmul.f32 %v647, %v250
    %v649 = vmul.f32 %v647, %v251
    %v650 = vadd.f32 %v644, %v648
    %v651 = vadd.f32 %v645, %v649
    %s652 = sld [smem:[#allocation9 + $0x183]]
    %v653 = vstv %s652
    %v654 = vmul.f32 %v653, %v292
    %v655 = vmul.f32 %v653, %v293
    %v656 = vadd.f32 %v650, %v654
    %v657 = vadd.f32 %v651, %v655
    %s658 = sld [smem:[#allocation9 + $0x184]]
    %v659 = vstv %s658
    %v660 = vmul.f32 %v659, %v334
    %v661 = vmul.f32 %v659, %v335
    %v662 = vadd.f32 %v656, %v660
    %v663 = vadd.f32 %v657, %v661
    %s664 = sld [smem:[#allocation9 + $0x185]]
    %v665 = vstv %s664
    %v666 = vmul.f32 %v665, %v376
    %v667 = vmul.f32 %v665, %v377
    %v668 = vadd.f32 %v662, %v666
    %v669 = vadd.f32 %v663, %v667
    %s670 = sld [smem:[#allocation9 + $0x186]]
    %v671 = vstv %s670
    %v672 = vmul.f32 %v671, %v418
    %v673 = vmul.f32 %v671, %v419
    %v674 = vadd.f32 %v668, %v672
    %v675 = vadd.f32 %v669, %v673
    %s676 = sld [smem:[#allocation9 + $0x187]]
    %v677 = vstv %s676
    %v678 = vmul.f32 %v677, %v460
    %v679 = vmul.f32 %v677, %v461
    %v680 = vadd.f32 %v674, %v678
    %v681 = vadd.f32 %v675, %v679
    %v682 = vxor.u32 %v680, 2147483648
    %v683 = vxor.u32 %v681, 2147483648
    %v684 = vmul.f32 %v682, 1.442695
    %v685 = vpow.pop %v684
    %v686 = vmul.f32 %v683, 1.442695
    %v687 = vpow.pop %v686
    %v688 = vadd.f32 %v685, 1.0
    %v689 = vadd.f32 %v687, 1.0
    %v690 = vrcp.pop %v688
    %v691 = vmul.f32 1.0, %v690
    %v692 = vrcp.pop %v689
    %v693 = vmul.f32 1.0, %v692
    %v694 = vadd.f32 %v517, %v575
    %v695 = vadd.f32 %v519, %v577
    %v696 = vadd.f32 %v694, %v633
    %v697 = vadd.f32 %v695, %v635
    %v698 = vadd.f32 %v696, %v691
    %v699 = vadd.f32 %v697, %v693
    %v700 = vmul.f32 %v698, 0.25
    %v701 = vmul.f32 %v699, 0.25
    %v702 = vrot.slane %v113, 4
    %v703 = vadd.f32 %v113, %v702
    %v704 = vrot.slane %v703, 2
    %v705 = vadd.f32 %v703, %v704
    %v706 = vrot.slane %v705, 1
    %v707 = vadd.f32 %v705, %v706
    %v708 = vrot.slane %v114, 4
    %v709 = vadd.f32 %v114, %v708
    %v710 = vrot.slane %v709, 2
    %v711 = vadd.f32 %v709, %v710
    %v712 = vrot.slane %v711, 1
    %v713 = vadd.f32 %v711, %v712
    %v714 = vrot.slane %v118, 4
    %v715 = vadd.f32 %v118, %v714
    %v716 = vrot.slane %v715, 2
    %v717 = vadd.f32 %v715, %v716
    %v718 = vrot.slane %v717, 1
    %v719 = vadd.f32 %v717, %v718
    %v720 = vrot.slane %v119, 4
    %v721 = vadd.f32 %v119, %v720
    %v722 = vrot.slane %v721, 2
    %v723 = vadd.f32 %v721, %v722
    %v724 = vrot.slane %v723, 1
    %v725 = vadd.f32 %v723, %v724
    %v726 = vrcp.pop 4.0
    %v727 = vmul.f32 %v707, %v726
    %v728 = vmul.f32 %v713, %v726
    %v729 = vmul.f32 %v719, %v726
    %v730 = vmul.f32 %v725, %v726
    %732 = vset.pattern.permute.xlu0 0
    %733 = vperm.xlu0 %732, %v700
    %v734 = vpop.permute.xlu0 %733
    %737 = vset.pattern.permute.xlu0 0
    %738 = vperm.xlu0 %737, %v701
    %v739 = vpop.permute.xlu0 %738
    %v741 = vadd.f32 %v727, %v734
    %v742 = vadd.f32 %v728, %v734
    %v743 = vadd.f32 %v729, %v739
    %v744 = vadd.f32 %v730, %v739
    %s745 = sld [smem:[#allocation11 + $0x81]]
    %v746 = vstv %s745
    %v747 = vmul.f32 %v746, %v741
    %v748 = vmul.f32 %v746, %v742
    %v749 = vmul.f32 %v746, %v743
    %v750 = vmul.f32 %v746, %v744
    %751 = vrot.lane.b32.xlu0 %v741, 17
    %v752 = vpop.permute.xlu0 %751
    %753 = vrot.lane.b32.xlu0 %v743, 17
    %v754 = vpop.permute.xlu0 %753
    %755 = vrot.lane.b32.xlu0 %v742, 17
    %v756 = vpop.permute.xlu0 %755
    %757 = vrot.lane.b32.xlu0 %v744, 17
    %v758 = vpop.permute.xlu0 %757
    %v759 = vlaneseq
    %v760 = vand.u32 %v759, 127
    %vm761 = vcmp.lt.s32.totalorder %v760, 17
    %v762 = vsel %vm761, %v752, %v756
    %v763 = vsel %vm761, %v754, %v758
    %v764 = vsel %vm761, %v756, %v752
    %v765 = vsel %vm761, %v758, %v754
    %vm766 = vcmp.ge.s32.totalorder %v104, 1
    %vm767 = vcmp.ge.s32.totalorder %v105, 1
    %vm768 = vmand %vm766, %vm767
    %s769 = sld [smem:[#allocation11]]
    %v770 = vsel %vm768, 1, 0
    %vm771 = vcmp.eq.s32.totalorder %v770, 1
    %v776 = vcombine.low %v764, %v762
    %v778 = vunpack.c.l.s4 1966171168
    %v779 = vunpack.c.0.s8 %v778
    %v780 = vlaneseq
    %v781 = vshrl.u32 %v780, 7
    %v782 = vsub.s32 %v779, %v781
    %v783 = vrot.slane %v776, %v782
    %v785 = vunpack.c.l.s4 1966171168
    %v786 = vunpack.c.0.s8 %v785
    %v787 = vlaneseq
    %v788 = vshrl.u32 %v787, 7
    %v789 = vsub.s32 %v786, %v788
    %v790 = vrot.slane %v783, %v789
    %v791 = vcombine.low %v765, %v763
    %v793 = vunpack.c.l.s4 1966171168
    %v794 = vunpack.c.0.s8 %v793
    %v795 = vlaneseq
    %v796 = vshrl.u32 %v795, 7
    %v797 = vsub.s32 %v794, %v796
    %v798 = vrot.slane %v791, %v797
    %v800 = vunpack.c.l.s4 1966171168
    %v801 = vunpack.c.0.s8 %v800
    %v802 = vlaneseq
    %v803 = vshrl.u32 %v802, 7
    %v804 = vsub.s32 %v801, %v803
    %v805 = vrot.slane %v798, %v804
    %v808 = vsel %vm771, %v790, 0.0
    %v809 = vsel %vm771, %v805, 0.0
    %v810 = vstv %s769
    %v811 = vmul.f32 %v810, %v808
    %v812 = vmul.f32 %v810, %v809
    %v815 = vlaneseq
    %v816 = vshrl.u32 %v815, 7
    %v817 = vsub.s32 0, %v816
    %v818 = vrot.slane %v811, %v817
    %v819 = vlaneseq
    %v820 = vshrl.u32 %v819, 7
    %v821 = vsub.s32 1, %v820
    %v822 = vrot.slane %v811, %v821
    %v823 = vlaneseq
    %v824 = vshrl.u32 %v823, 7
    %v825 = vsub.s32 0, %v824
    %v826 = vrot.slane %v812, %v825
    %v827 = vlaneseq
    %v828 = vshrl.u32 %v827, 7
    %v829 = vsub.s32 1, %v828
    %v830 = vrot.slane %v812, %v829
    %v835 = vadd.f32 %v747, %v818
    %v836 = vadd.f32 %v748, %v822
    %v837 = vadd.f32 %v749, %v826
    %v838 = vadd.f32 %v750, %v830
    %839 = vrot.lane.b32.xlu0 %v741, 16
    %v840 = vpop.permute.xlu0 %839
    %841 = vrot.lane.b32.xlu0 %v743, 16
    %v842 = vpop.permute.xlu0 %841
    %843 = vrot.lane.b32.xlu0 %v742, 16
    %v844 = vpop.permute.xlu0 %843
    %845 = vrot.lane.b32.xlu0 %v744, 16
    %v846 = vpop.permute.xlu0 %845
    %vm847 = vcmp.lt.s32.totalorder %v760, 16
    %v848 = vsel %vm847, %v840, %v844
    %v849 = vsel %vm847, %v842, %v846
    %v850 = vsel %vm847, %v844, %v840
    %v851 = vsel %vm847, %v846, %v842
    %s852 = sld [smem:[#allocation11 + $0x1]]
    %v853 = vsel %vm766, 1, 0
    %vm854 = vcmp.eq.s32.totalorder %v853, 1
    %v859 = vcombine.low %v850, %v848
    %v861 = vunpack.c.l.s4 1966171168
    %v862 = vunpack.c.0.s8 %v861
    %v863 = vlaneseq
    %v864 = vshrl.u32 %v863, 7
    %v865 = vsub.s32 %v862, %v864
    %v866 = vrot.slane %v859, %v865
    %v868 = vunpack.c.l.s4 1966171168
    %v869 = vunpack.c.0.s8 %v868
    %v870 = vlaneseq
    %v871 = vshrl.u32 %v870, 7
    %v872 = vsub.s32 %v869, %v871
    %v873 = vrot.slane %v866, %v872
    %v874 = vcombine.low %v851, %v849
    %v876 = vunpack.c.l.s4 1966171168
    %v877 = vunpack.c.0.s8 %v876
    %v878 = vlaneseq
    %v879 = vshrl.u32 %v878, 7
    %v880 = vsub.s32 %v877, %v879
    %v881 = vrot.slane %v874, %v880
    %v883 = vunpack.c.l.s4 1966171168
    %v884 = vunpack.c.0.s8 %v883
    %v885 = vlaneseq
    %v886 = vshrl.u32 %v885, 7
    %v887 = vsub.s32 %v884, %v886
    %v888 = vrot.slane %v881, %v887
    %v891 = vsel %vm854, %v873, 0.0
    %v892 = vsel %vm854, %v888, 0.0
    %v893 = vstv %s852
    %v894 = vmul.f32 %v893, %v891
    %v895 = vmul.f32 %v893, %v892
    %v898 = vlaneseq
    %v899 = vshrl.u32 %v898, 7
    %v900 = vsub.s32 0, %v899
    %v901 = vrot.slane %v894, %v900
    %v902 = vlaneseq
    %v903 = vshrl.u32 %v902, 7
    %v904 = vsub.s32 1, %v903
    %v905 = vrot.slane %v894, %v904
    %v906 = vlaneseq
    %v907 = vshrl.u32 %v906, 7
    %v908 = vsub.s32 0, %v907
    %v909 = vrot.slane %v895, %v908
    %v910 = vlaneseq
    %v911 = vshrl.u32 %v910, 7
    %v912 = vsub.s32 1, %v911
    %v913 = vrot.slane %v895, %v912
    %v918 = vadd.f32 %v835, %v901
    %v919 = vadd.f32 %v836, %v905
    %v920 = vadd.f32 %v837, %v909
    %v921 = vadd.f32 %v838, %v913
    %922 = vrot.lane.b32.xlu0 %v741, 15
    %v923 = vpop.permute.xlu0 %922
    %924 = vrot.lane.b32.xlu0 %v743, 15
    %v925 = vpop.permute.xlu0 %924
    %926 = vrot.lane.b32.xlu0 %v742, 15
    %v927 = vpop.permute.xlu0 %926
    %928 = vrot.lane.b32.xlu0 %v744, 15
    %v929 = vpop.permute.xlu0 %928
    %vm930 = vcmp.lt.s32.totalorder %v760, 15
    %v931 = vsel %vm930, %v923, %v927
    %v932 = vsel %vm930, %v925, %v929
    %v933 = vsel %vm930, %v927, %v923
    %v934 = vsel %vm930, %v929, %v925
    %vm935 = vcmp.le.s32.totalorder %v105, 14
    %vm936 = vmand %vm766, %vm935
    %s937 = sld [smem:[#allocation11 + $0x2]]
    %v938 = vsel %vm936, 1, 0
    %vm939 = vcmp.eq.s32.totalorder %v938, 1
    %v944 = vcombine.low %v933, %v931
    %v946 = vunpack.c.l.s4 1966171168
    %v947 = vunpack.c.0.s8 %v946
    %v948 = vlaneseq
    %v949 = vshrl.u32 %v948, 7
    %v950 = vsub.s32 %v947, %v949
    %v951 = vrot.slane %v944, %v950
    %v953 = vunpack.c.l.s4 1966171168
    %v954 = vunpack.c.0.s8 %v953
    %v955 = vlaneseq
    %v956 = vshrl.u32 %v955, 7
    %v957 = vsub.s32 %v954, %v956
    %v958 = vrot.slane %v951, %v957
    %v959 = vcombine.low %v934, %v932
    %v961 = vunpack.c.l.s4 1966171168
    %v962 = vunpack.c.0.s8 %v961
    %v963 = vlaneseq
    %v964 = vshrl.u32 %v963, 7
    %v965 = vsub.s32 %v962, %v964
    %v966 = vrot.slane %v959, %v965
    %v968 = vunpack.c.l.s4 1966171168
    %v969 = vunpack.c.0.s8 %v968
    %v970 = vlaneseq
    %v971 = vshrl.u32 %v970, 7
    %v972 = vsub.s32 %v969, %v971
    %v973 = vrot.slane %v966, %v972
    %v976 = vsel %vm939, %v958, 0.0
    %v977 = vsel %vm939, %v973, 0.0
    %v978 = vstv %s937
    %v979 = vmul.f32 %v978, %v976
    %v980 = vmul.f32 %v978, %v977
    %v983 = vlaneseq
    %v984 = vshrl.u32 %v983, 7
    %v985 = vsub.s32 0, %v984
    %v986 = vrot.slane %v979, %v985
    %v987 = vlaneseq
    %v988 = vshrl.u32 %v987, 7
    %v989 = vsub.s32 1, %v988
    %v990 = vrot.slane %v979, %v989
    %v991 = vlaneseq
    %v992 = vshrl.u32 %v991, 7
    %v993 = vsub.s32 0, %v992
    %v994 = vrot.slane %v980, %v993
    %v995 = vlaneseq
    %v996 = vshrl.u32 %v995, 7
    %v997 = vsub.s32 1, %v996
    %v998 = vrot.slane %v980, %v997
    %v1003 = vadd.f32 %v918, %v986
    %v1004 = vadd.f32 %v919, %v990
    %v1005 = vadd.f32 %v920, %v994
    %v1006 = vadd.f32 %v921, %v998
    %1007 = vrot.lane.b32.xlu0 %v741, 1
    %v1008 = vpop.permute.xlu0 %1007
    %1009 = vrot.lane.b32.xlu0 %v743, 1
    %v1010 = vpop.permute.xlu0 %1009
    %1011 = vrot.lane.b32.xlu0 %v742, 1
    %v1012 = vpop.permute.xlu0 %1011
    %1013 = vrot.lane.b32.xlu0 %v744, 1
    %v1014 = vpop.permute.xlu0 %1013
    %vm1015 = vcmp.lt.s32.totalorder %v760, 1
    %v1016 = vsel %vm1015, %v1008, %v1012
    %v1017 = vsel %vm1015, %v1010, %v1014
    %v1018 = vsel %vm1015, %v1012, %v1008
    %v1019 = vsel %vm1015, %v1014, %v1010
    %s1020 = sld [smem:[#allocation11 + $0x80]]
    %v1021 = vsel %vm767, 1, 0
    %vm1022 = vcmp.eq.s32.totalorder %v1021, 1
    %v1027 = vcombine.low %v1018, %v1016
    %v1029 = vunpack.c.l.s4 1966171168
    %v1030 = vunpack.c.0.s8 %v1029
    %v1031 = vlaneseq
    %v1032 = vshrl.u32 %v1031, 7
    %v1033 = vsub.s32 %v1030, %v1032
    %v1034 = vrot.slane %v1027, %v1033
    %v1036 = vunpack.c.l.s4 1966171168
    %v1037 = vunpack.c.0.s8 %v1036
    %v1038 = vlaneseq
    %v1039 = vshrl.u32 %v1038, 7
    %v1040 = vsub.s32 %v1037, %v1039
    %v1041 = vrot.slane %v1034, %v1040
    %v1042 = vcombine.low %v1019, %v1017
    %v1044 = vunpack.c.l.s4 1966171168
    %v1045 = vunpack.c.0.s8 %v1044
    %v1046 = vlaneseq
    %v1047 = vshrl.u32 %v1046, 7
    %v1048 = vsub.s32 %v1045, %v1047
    %v1049 = vrot.slane %v1042, %v1048
    %v1051 = vunpack.c.l.s4 1966171168
    %v1052 = vunpack.c.0.s8 %v1051
    %v1053 = vlaneseq
    %v1054 = vshrl.u32 %v1053, 7
    %v1055 = vsub.s32 %v1052, %v1054
    %v1056 = vrot.slane %v1049, %v1055
    %v1059 = vsel %vm1022, %v1041, 0.0
    %v1060 = vsel %vm1022, %v1056, 0.0
    %v1061 = vstv %s1020
    %v1062 = vmul.f32 %v1061, %v1059
    %v1063 = vmul.f32 %v1061, %v1060
    %v1066 = vlaneseq
    %v1067 = vshrl.u32 %v1066, 7
    %v1068 = vsub.s32 0, %v1067
    %v1069 = vrot.slane %v1062, %v1068
    %v1070 = vlaneseq
    %v1071 = vshrl.u32 %v1070, 7
    %v1072 = vsub.s32 1, %v1071
    %v1073 = vrot.slane %v1062, %v1072
    %v1074 = vlaneseq
    %v1075 = vshrl.u32 %v1074, 7
    %v1076 = vsub.s32 0, %v1075
    %v1077 = vrot.slane %v1063, %v1076
    %v1078 = vlaneseq
    %v1079 = vshrl.u32 %v1078, 7
    %v1080 = vsub.s32 1, %v1079
    %v1081 = vrot.slane %v1063, %v1080
    %v1086 = vadd.f32 %v1003, %v1069
    %v1087 = vadd.f32 %v1004, %v1073
    %v1088 = vadd.f32 %v1005, %v1077
    %v1089 = vadd.f32 %v1006, %v1081
    %1090 = vrot.lane.b32.xlu0 %v741, 127
    %v1091 = vpop.permute.xlu0 %1090
    %1092 = vrot.lane.b32.xlu0 %v743, 127
    %v1093 = vpop.permute.xlu0 %1092
    %1094 = vrot.lane.b32.xlu0 %v742, 127
    %v1095 = vpop.permute.xlu0 %1094
    %1096 = vrot.lane.b32.xlu0 %v744, 127
    %v1097 = vpop.permute.xlu0 %1096
    %vm1098 = vcmp.lt.s32.totalorder %v760, 127
    %v1099 = vsel %vm1098, %v1091, %v1095
    %v1100 = vsel %vm1098, %v1093, %v1097
    %v1101 = vsel %vm1098, %v1095, %v1091
    %v1102 = vsel %vm1098, %v1097, %v1093
    %s1103 = sld [smem:[#allocation11 + $0x82]]
    %v1104 = vsel %vm935, 1, 0
    %vm1105 = vcmp.eq.s32.totalorder %v1104, 1
    %v1110 = vcombine.low %v1099, %v1101
    %v1112 = vunpack.c.l.s4 1966171168
    %v1113 = vunpack.c.0.s8 %v1112
    %v1114 = vlaneseq
    %v1115 = vshrl.u32 %v1114, 7
    %v1116 = vsub.s32 %v1113, %v1115
    %v1117 = vrot.slane %v1110, %v1116
    %v1119 = vunpack.c.l.s4 1966171168
    %v1120 = vunpack.c.0.s8 %v1119
    %v1121 = vlaneseq
    %v1122 = vshrl.u32 %v1121, 7
    %v1123 = vsub.s32 %v1120, %v1122
    %v1124 = vrot.slane %v1117, %v1123
    %v1125 = vcombine.low %v1100, %v1102
    %v1127 = vunpack.c.l.s4 1966171168
    %v1128 = vunpack.c.0.s8 %v1127
    %v1129 = vlaneseq
    %v1130 = vshrl.u32 %v1129, 7
    %v1131 = vsub.s32 %v1128, %v1130
    %v1132 = vrot.slane %v1125, %v1131
    %v1134 = vunpack.c.l.s4 1966171168
    %v1135 = vunpack.c.0.s8 %v1134
    %v1136 = vlaneseq
    %v1137 = vshrl.u32 %v1136, 7
    %v1138 = vsub.s32 %v1135, %v1137
    %v1139 = vrot.slane %v1132, %v1138
    %v1142 = vsel %vm1105, %v1124, 0.0
    %v1143 = vsel %vm1105, %v1139, 0.0
    %v1144 = vstv %s1103
    %v1145 = vmul.f32 %v1144, %v1142
    %v1146 = vmul.f32 %v1144, %v1143
    %v1149 = vlaneseq
    %v1150 = vshrl.u32 %v1149, 7
    %v1151 = vsub.s32 0, %v1150
    %v1152 = vrot.slane %v1145, %v1151
    %v1153 = vlaneseq
    %v1154 = vshrl.u32 %v1153, 7
    %v1155 = vsub.s32 1, %v1154
    %v1156 = vrot.slane %v1145, %v1155
    %v1157 = vlaneseq
    %v1158 = vshrl.u32 %v1157, 7
    %v1159 = vsub.s32 0, %v1158
    %v1160 = vrot.slane %v1146, %v1159
    %v1161 = vlaneseq
    %v1162 = vshrl.u32 %v1161, 7
    %v1163 = vsub.s32 1, %v1162
    %v1164 = vrot.slane %v1146, %v1163
    %v1169 = vadd.f32 %v1086, %v1152
    %v1170 = vadd.f32 %v1087, %v1156
    %v1171 = vadd.f32 %v1088, %v1160
    %v1172 = vadd.f32 %v1089, %v1164
    %1173 = vrot.lane.b32.xlu0 %v741, 113
    %v1174 = vpop.permute.xlu0 %1173
    %1175 = vrot.lane.b32.xlu0 %v743, 113
    %v1176 = vpop.permute.xlu0 %1175
    %1177 = vrot.lane.b32.xlu0 %v742, 113
    %v1178 = vpop.permute.xlu0 %1177
    %1179 = vrot.lane.b32.xlu0 %v744, 113
    %v1180 = vpop.permute.xlu0 %1179
    %vm1181 = vcmp.lt.s32.totalorder %v760, 113
    %v1182 = vsel %vm1181, %v1174, %v1178
    %v1183 = vsel %vm1181, %v1176, %v1180
    %v1184 = vsel %vm1181, %v1178, %v1174
    %v1185 = vsel %vm1181, %v1180, %v1176
    %vm1186 = vcmp.le.s32.totalorder %v104, 14
    %vm1187 = vmand %vm1186, %vm767
    %s1188 = sld [smem:[#allocation11 + $0x100]]
    %v1189 = vsel %vm1187, 1, 0
    %vm1190 = vcmp.eq.s32.totalorder %v1189, 1
    %v1195 = vcombine.low %v1182, %v1184
    %v1197 = vunpack.c.l.s4 1966171168
    %v1198 = vunpack.c.0.s8 %v1197
    %v1199 = vlaneseq
    %v1200 = vshrl.u32 %v1199, 7
    %v1201 = vsub.s32 %v1198, %v1200
    %v1202 = vrot.slane %v1195, %v1201
    %v1204 = vunpack.c.l.s4 1966171168
    %v1205 = vunpack.c.0.s8 %v1204
    %v1206 = vlaneseq
    %v1207 = vshrl.u32 %v1206, 7
    %v1208 = vsub.s32 %v1205, %v1207
    %v1209 = vrot.slane %v1202, %v1208
    %v1210 = vcombine.low %v1183, %v1185
    %v1212 = vunpack.c.l.s4 1966171168
    %v1213 = vunpack.c.0.s8 %v1212
    %v1214 = vlaneseq
    %v1215 = vshrl.u32 %v1214, 7
    %v1216 = vsub.s32 %v1213, %v1215
    %v1217 = vrot.slane %v1210, %v1216
    %v1219 = vunpack.c.l.s4 1966171168
    %v1220 = vunpack.c.0.s8 %v1219
    %v1221 = vlaneseq
    %v1222 = vshrl.u32 %v1221, 7
    %v1223 = vsub.s32 %v1220, %v1222
    %v1224 = vrot.slane %v1217, %v1223
    %v1227 = vsel %vm1190, %v1209, 0.0
    %v1228 = vsel %vm1190, %v1224, 0.0
    %v1229 = vstv %s1188
    %v1230 = vmul.f32 %v1229, %v1227
    %v1231 = vmul.f32 %v1229, %v1228
    %v1234 = vlaneseq
    %v1235 = vshrl.u32 %v1234, 7
    %v1236 = vsub.s32 0, %v1235
    %v1237 = vrot.slane %v1230, %v1236
    %v1238 = vlaneseq
    %v1239 = vshrl.u32 %v1238, 7
    %v1240 = vsub.s32 1, %v1239
    %v1241 = vrot.slane %v1230, %v1240
    %v1242 = vlaneseq
    %v1243 = vshrl.u32 %v1242, 7
    %v1244 = vsub.s32 0, %v1243
    %v1245 = vrot.slane %v1231, %v1244
    %v1246 = vlaneseq
    %v1247 = vshrl.u32 %v1246, 7
    %v1248 = vsub.s32 1, %v1247
    %v1249 = vrot.slane %v1231, %v1248
    %v1254 = vadd.f32 %v1169, %v1237
    %v1255 = vadd.f32 %v1170, %v1241
    %v1256 = vadd.f32 %v1171, %v1245
    %v1257 = vadd.f32 %v1172, %v1249
    %1258 = vrot.lane.b32.xlu0 %v741, 112
    %v1259 = vpop.permute.xlu0 %1258
    %1260 = vrot.lane.b32.xlu0 %v743, 112
    %v1261 = vpop.permute.xlu0 %1260
    %1262 = vrot.lane.b32.xlu0 %v742, 112
    %v1263 = vpop.permute.xlu0 %1262
    %1264 = vrot.lane.b32.xlu0 %v744, 112
    %v1265 = vpop.permute.xlu0 %1264
    %vm1266 = vcmp.lt.s32.totalorder %v760, 112
    %v1267 = vsel %vm1266, %v1259, %v1263
    %v1268 = vsel %vm1266, %v1261, %v1265
    %v1269 = vsel %vm1266, %v1263, %v1259
    %v1270 = vsel %vm1266, %v1265, %v1261
    %s1271 = sld [smem:[#allocation11 + $0x101]]
    %v1272 = vsel %vm1186, 1, 0
    %vm1273 = vcmp.eq.s32.totalorder %v1272, 1
    %v1278 = vcombine.low %v1267, %v1269
    %v1280 = vunpack.c.l.s4 1966171168
    %v1281 = vunpack.c.0.s8 %v1280
    %v1282 = vlaneseq
    %v1283 = vshrl.u32 %v1282, 7
    %v1284 = vsub.s32 %v1281, %v1283
    %v1285 = vrot.slane %v1278, %v1284
    %v1287 = vunpack.c.l.s4 1966171168
    %v1288 = vunpack.c.0.s8 %v1287
    %v1289 = vlaneseq
    %v1290 = vshrl.u32 %v1289, 7
    %v1291 = vsub.s32 %v1288, %v1290
    %v1292 = vrot.slane %v1285, %v1291
    %v1293 = vcombine.low %v1268, %v1270
    %v1295 = vunpack.c.l.s4 1966171168
    %v1296 = vunpack.c.0.s8 %v1295
    %v1297 = vlaneseq
    %v1298 = vshrl.u32 %v1297, 7
    %v1299 = vsub.s32 %v1296, %v1298
    %v1300 = vrot.slane %v1293, %v1299
    %v1302 = vunpack.c.l.s4 1966171168
    %v1303 = vunpack.c.0.s8 %v1302
    %v1304 = vlaneseq
    %v1305 = vshrl.u32 %v1304, 7
    %v1306 = vsub.s32 %v1303, %v1305
    %v1307 = vrot.slane %v1300, %v1306
    %v1310 = vsel %vm1273, %v1292, 0.0
    %v1311 = vsel %vm1273, %v1307, 0.0
    %v1312 = vstv %s1271
    %v1313 = vmul.f32 %v1312, %v1310
    %v1314 = vmul.f32 %v1312, %v1311
    %v1317 = vlaneseq
    %v1318 = vshrl.u32 %v1317, 7
    %v1319 = vsub.s32 0, %v1318
    %v1320 = vrot.slane %v1313, %v1319
    %v1321 = vlaneseq
    %v1322 = vshrl.u32 %v1321, 7
    %v1323 = vsub.s32 1, %v1322
    %v1324 = vrot.slane %v1313, %v1323
    %v1325 = vlaneseq
    %v1326 = vshrl.u32 %v1325, 7
    %v1327 = vsub.s32 0, %v1326
    %v1328 = vrot.slane %v1314, %v1327
    %v1329 = vlaneseq
    %v1330 = vshrl.u32 %v1329, 7
    %v1331 = vsub.s32 1, %v1330
    %v1332 = vrot.slane %v1314, %v1331
    %v1337 = vadd.f32 %v1254, %v1320
    %v1338 = vadd.f32 %v1255, %v1324
    %v1339 = vadd.f32 %v1256, %v1328
    %v1340 = vadd.f32 %v1257, %v1332
    %1341 = vrot.lane.b32.xlu0 %v741, 111
    %v1342 = vpop.permute.xlu0 %1341
    %1343 = vrot.lane.b32.xlu0 %v743, 111
    %v1344 = vpop.permute.xlu0 %1343
    %1345 = vrot.lane.b32.xlu0 %v742, 111
    %v1346 = vpop.permute.xlu0 %1345
    %1347 = vrot.lane.b32.xlu0 %v744, 111
    %v1348 = vpop.permute.xlu0 %1347
    %vm1349 = vcmp.lt.s32.totalorder %v760, 111
    %v1350 = vsel %vm1349, %v1342, %v1346
    %v1351 = vsel %vm1349, %v1344, %v1348
    %v1352 = vsel %vm1349, %v1346, %v1342
    %v1353 = vsel %vm1349, %v1348, %v1344
    %vm1354 = vmand %vm1186, %vm935
    %s1355 = sld [smem:[#allocation11 + $0x102]]
    %v1356 = vsel %vm1354, 1, 0
    %vm1357 = vcmp.eq.s32.totalorder %v1356, 1
    %v1362 = vcombine.low %v1350, %v1352
    %v1364 = vunpack.c.l.s4 1966171168
    %v1365 = vunpack.c.0.s8 %v1364
    %v1366 = vlaneseq
    %v1367 = vshrl.u32 %v1366, 7
    %v1368 = vsub.s32 %v1365, %v1367
    %v1369 = vrot.slane %v1362, %v1368
    %v1371 = vunpack.c.l.s4 1966171168
    %v1372 = vunpack.c.0.s8 %v1371
    %v1373 = vlaneseq
    %v1374 = vshrl.u32 %v1373, 7
    %v1375 = vsub.s32 %v1372, %v1374
    %v1376 = vrot.slane %v1369, %v1375
    %v1377 = vcombine.low %v1351, %v1353
    %v1379 = vunpack.c.l.s4 1966171168
    %v1380 = vunpack.c.0.s8 %v1379
    %v1381 = vlaneseq
    %v1382 = vshrl.u32 %v1381, 7
    %v1383 = vsub.s32 %v1380, %v1382
    %v1384 = vrot.slane %v1377, %v1383
    %v1386 = vunpack.c.l.s4 1966171168
    %v1387 = vunpack.c.0.s8 %v1386
    %v1388 = vlaneseq
    %v1389 = vshrl.u32 %v1388, 7
    %v1390 = vsub.s32 %v1387, %v1389
    %v1391 = vrot.slane %v1384, %v1390
    %v1394 = vsel %vm1357, %v1376, 0.0
    %v1395 = vsel %vm1357, %v1391, 0.0
    %v1396 = vstv %s1355
    %v1397 = vmul.f32 %v1396, %v1394
    %v1398 = vmul.f32 %v1396, %v1395
    %v1401 = vlaneseq
    %v1402 = vshrl.u32 %v1401, 7
    %v1403 = vsub.s32 0, %v1402
    %v1404 = vrot.slane %v1397, %v1403
    %v1405 = vlaneseq
    %v1406 = vshrl.u32 %v1405, 7
    %v1407 = vsub.s32 1, %v1406
    %v1408 = vrot.slane %v1397, %v1407
    %v1409 = vlaneseq
    %v1410 = vshrl.u32 %v1409, 7
    %v1411 = vsub.s32 0, %v1410
    %v1412 = vrot.slane %v1398, %v1411
    %v1413 = vlaneseq
    %v1414 = vshrl.u32 %v1413, 7
    %v1415 = vsub.s32 1, %v1414
    %v1416 = vrot.slane %v1398, %v1415
    %v1421 = vadd.f32 %v1337, %v1404
    %v1422 = vadd.f32 %v1338, %v1408
    %v1423 = vadd.f32 %v1339, %v1412
    %v1424 = vadd.f32 %v1340, %v1416
    %s1425 = sld [smem:[#allocation2]]
    %v1426 = vmax.f32 %v1421, 0.0
    %v1427 = vmax.f32 %v1422, 0.0
    %v1428 = vmax.f32 %v1423, 0.0
    %v1429 = vmax.f32 %v1424, 0.0
    %v1430 = vstv %s1425
    %v1431 = vmul.f32 %v1430, %v1426
    %v1432 = vmul.f32 %v1430, %v1427
    %v1433 = vmul.f32 %v1430, %v1428
    %v1434 = vmul.f32 %v1430, %v1429
    %v1435 = vxor.u32 %v1431, 2147483648
    %v1436 = vxor.u32 %v1432, 2147483648
    %v1437 = vxor.u32 %v1433, 2147483648
    %v1438 = vxor.u32 %v1434, 2147483648
    %v1439 = vmul.f32 %v1435, 1.442695
    %v1440 = vpow.pop %v1439
    %v1441 = vmul.f32 %v1436, 1.442695
    %v1442 = vpow.pop %v1441
    %v1443 = vmul.f32 %v1437, 1.442695
    %v1444 = vpow.pop %v1443
    %v1445 = vmul.f32 %v1438, 1.442695
    %v1446 = vpow.pop %v1445
    %v1447 = vadd.f32 %v1440, 1.0
    %v1448 = vadd.f32 %v1442, 1.0
    %v1449 = vadd.f32 %v1444, 1.0
    %v1450 = vadd.f32 %v1446, 1.0
    %v1451 = vrcp.pop %v1447
    %v1452 = vmul.f32 1.0, %v1451
    %v1453 = vrcp.pop %v1448
    %v1454 = vmul.f32 1.0, %v1453
    %v1455 = vrcp.pop %v1449
    %v1456 = vmul.f32 1.0, %v1455
    %v1457 = vrcp.pop %v1450
    %v1458 = vmul.f32 1.0, %v1457
    %1460 = vset.pattern.permute.xlu0 0
    %1461 = vperm.xlu0 %1460, %v517
    %v1462 = vpop.permute.xlu0 %1461
    %1464 = vset.pattern.permute.xlu0 0
    %1465 = vperm.xlu0 %1464, %v519
    %v1466 = vpop.permute.xlu0 %1465
    %v1468 = vunpack.c.l.s4 839922192
    %v1469 = vunpack.c.0.s8 %v1468
    %v1470 = vlaneseq
    %v1471 = vshrl.u32 %v1470, 7
    %v1472 = vsub.s32 %v1469, %v1471
    %v1473 = vrot.slane %v1462, %v1472
    %v1475 = vunpack.c.l.s4 839922192
    %v1476 = vunpack.c.0.s8 %v1475
    %v1477 = vlaneseq
    %v1478 = vshrl.u32 %v1477, 7
    %v1479 = vsub.s32 %v1476, %v1478
    %v1480 = vrot.slane %v1466, %v1479
    %v1483 = vadd.f32 %v102, %v1473
    %v1484 = vadd.f32 %v103, %v1480
    %v1489 = vcombine.low %v1452, %v1454
    %v1490 = vcombine.low %v1456, %v1458
    %v1493 = vadd.f32 %v1483, %v1489
    %v1494 = vadd.f32 %v1484, %v1490
    %1496 = vset.pattern.permute.xlu0 0
    %1497 = vperm.xlu0 %1496, %v575
    %v1498 = vpop.permute.xlu0 %1497
    %1500 = vset.pattern.permute.xlu0 0
    %1501 = vperm.xlu0 %1500, %v577
    %v1502 = vpop.permute.xlu0 %1501
    %v1504 = vunpack.c.l.s4 839922192
    %v1505 = vunpack.c.0.s8 %v1504
    %v1506 = vlaneseq
    %v1507 = vshrl.u32 %v1506, 7
    %v1508 = vsub.s32 %v1505, %v1507
    %v1509 = vrot.slane %v1498, %v1508
    %v1511 = vunpack.c.l.s4 839922192
    %v1512 = vunpack.c.0.s8 %v1511
    %v1513 = vlaneseq
    %v1514 = vshrl.u32 %v1513, 7
    %v1515 = vsub.s32 %v1512, %v1514
    %v1516 = vrot.slane %v1502, %v1515
    %v1517 = vrot.slane %v1509, 7
    %v1518 = vrot.slane %v1516, 7
    %v1521 = vadd.f32 %v102, %v1517
    %v1522 = vadd.f32 %v103, %v1518
    %v1523 = vrot.slane %v1489, 7
    %v1524 = vrot.slane %v1490, 7
    %v1527 = vadd.f32 %v1521, %v1523
    %v1528 = vadd.f32 %v1522, %v1524
    %1530 = vset.pattern.permute.xlu0 0
    %1531 = vperm.xlu0 %1530, %v633
    %v1532 = vpop.permute.xlu0 %1531
    %1534 = vset.pattern.permute.xlu0 0
    %1535 = vperm.xlu0 %1534, %v635
    %v1536 = vpop.permute.xlu0 %1535
    %v1538 = vunpack.c.l.s4 839922192
    %v1539 = vunpack.c.0.s8 %v1538
    %v1540 = vlaneseq
    %v1541 = vshrl.u32 %v1540, 7
    %v1542 = vsub.s32 %v1539, %v1541
    %v1543 = vrot.slane %v1532, %v1542
    %v1545 = vunpack.c.l.s4 839922192
    %v1546 = vunpack.c.0.s8 %v1545
    %v1547 = vlaneseq
    %v1548 = vshrl.u32 %v1547, 7
    %v1549 = vsub.s32 %v1546, %v1548
    %v1550 = vrot.slane %v1536, %v1549
    %v1551 = vrot.slane %v1543, 6
    %v1552 = vrot.slane %v1550, 6
    %v1555 = vadd.f32 %v102, %v1551
    %v1556 = vadd.f32 %v103, %v1552
    %v1557 = vrot.slane %v1489, 6
    %v1558 = vrot.slane %v1490, 6
    %v1561 = vadd.f32 %v1555, %v1557
    %v1562 = vadd.f32 %v1556, %v1558
    %1564 = vset.pattern.permute.xlu0 0
    %1565 = vperm.xlu0 %1564, %v691
    %v1566 = vpop.permute.xlu0 %1565
    %1568 = vset.pattern.permute.xlu0 0
    %1569 = vperm.xlu0 %1568, %v693
    %v1570 = vpop.permute.xlu0 %1569
    %v1572 = vunpack.c.l.s4 839922192
    %v1573 = vunpack.c.0.s8 %v1572
    %v1574 = vlaneseq
    %v1575 = vshrl.u32 %v1574, 7
    %v1576 = vsub.s32 %v1573, %v1575
    %v1577 = vrot.slane %v1566, %v1576
    %v1579 = vunpack.c.l.s4 839922192
    %v1580 = vunpack.c.0.s8 %v1579
    %v1581 = vlaneseq
    %v1582 = vshrl.u32 %v1581, 7
    %v1583 = vsub.s32 %v1580, %v1582
    %v1584 = vrot.slane %v1570, %v1583
    %v1585 = vrot.slane %v1577, 5
    %v1586 = vrot.slane %v1584, 5
    %v1589 = vadd.f32 %v102, %v1585
    %v1590 = vadd.f32 %v103, %v1586
    %v1591 = vrot.slane %v1489, 5
    %v1592 = vrot.slane %v1490, 5
    %v1595 = vadd.f32 %v1589, %v1591
    %v1596 = vadd.f32 %v1590, %v1592
    %s1597 = sld [smem:[#allocation12]]
    %v1598 = vstv %s1597
    %v1599 = vmul.f32 %v1598, %v1493
    %v1600 = vmul.f32 %v1598, %v1494
    %s1601 = sld [smem:[#allocation12 + $0x1]]
    %v1602 = vstv %s1601
    %v1603 = vmul.f32 %v1602, %v1527
    %v1604 = vmul.f32 %v1602, %v1528
    %v1607 = vrot.slane %v1603, 5
    %v1608 = vrot.slane %v1607, 4
    %v1609 = vrot.slane %v1604, 5
    %v1610 = vrot.slane %v1609, 4
    %v1613 = vadd.f32 %v1599, %v1608
    %v1614 = vadd.f32 %v1600, %v1610
    %s1615 = sld [smem:[#allocation12 + $0x2]]
    %v1616 = vstv %s1615
    %v1617 = vmul.f32 %v1616, %v1561
    %v1618 = vmul.f32 %v1616, %v1562
    %v1621 = vrot.slane %v1617, 6
    %v1622 = vrot.slane %v1621, 4
    %v1623 = vrot.slane %v1618, 6
    %v1624 = vrot.slane %v1623, 4
    %v1627 = vadd.f32 %v1613, %v1622
    %v1628 = vadd.f32 %v1614, %v1624
    %s1629 = sld [smem:[#allocation12 + $0x3]]
    %v1630 = vstv %s1629
    %v1631 = vmul.f32 %v1630, %v1595
    %v1632 = vmul.f32 %v1630, %v1596
    %v1635 = vrot.slane %v1631, 7
    %v1636 = vrot.slane %v1635, 4
    %v1637 = vrot.slane %v1632, 7
    %v1638 = vrot.slane %v1637, 4
    %v1641 = vadd.f32 %v1627, %v1636
    %v1642 = vadd.f32 %v1628, %v1638
    %v1643 = vxor.u32 %v1641, 2147483648
    %v1644 = vxor.u32 %v1642, 2147483648
    %v1645 = vmul.f32 %v1643, 1.442695
    %v1646 = vpow.pop %v1645
    %v1647 = vmul.f32 %v1644, 1.442695
    %v1648 = vpow.pop %v1647
    %v1649 = vadd.f32 %v1646, 1.0
    %v1650 = vadd.f32 %v1648, 1.0
    %v1651 = vrcp.pop %v1649
    %v1652 = vmul.f32 1.0, %v1651
    %v1653 = vrcp.pop %v1650
    %v1654 = vmul.f32 1.0, %v1653
    %v1658 = vunpack.c.l.s4 1966171168
    %v1659 = vunpack.c.0.s8 %v1658
    %v1660 = vlaneseq
    %v1661 = vshrl.u32 %v1660, 7
    %v1662 = vsub.s32 %v1659, %v1661
    %v1663 = vrot.slane %v1652, %v1662
    %v1665 = vunpack.c.l.s4 1966171168
    %v1666 = vunpack.c.0.s8 %v1665
    %v1667 = vlaneseq
    %v1668 = vshrl.u32 %v1667, 7
    %v1669 = vsub.s32 %v1666, %v1668
    %v1670 = vrot.slane %v1663, %v1669
    %v1672 = vunpack.c.l.s4 1966171168
    %v1673 = vunpack.c.0.s8 %v1672
    %v1674 = vlaneseq
    %v1675 = vshrl.u32 %v1674, 7
    %v1676 = vsub.s32 %v1673, %v1675
    %v1677 = vrot.slane %v1654, %v1676
    %v1679 = vunpack.c.l.s4 1966171168
    %v1680 = vunpack.c.0.s8 %v1679
    %v1681 = vlaneseq
    %v1682 = vshrl.u32 %v1681, 7
    %v1683 = vsub.s32 %v1680, %v1682
    %v1684 = vrot.slane %v1677, %v1683
    %v1687 = vlaneseq
    %vm1688 = vcmp.ge.s32.totalorder %v1687, 0
    %vm1689 = vcmp.lt.s32.totalorder %v1687, 256
    %vm1690 = vmand %vm1688, %vm1689
    %1691 = vst.msk [vmem:[%s8] ss:$8 sm:$0x3] %vm1690, %v1670
    %1692 = vst.msk [vmem:[%s8] ss:$8 sm:$0x0] %vm1690, %v1670
    %s1693 = scalar_lea.vmem %s8, 16
    %1694 = vst.msk [vmem:[%s1693] ss:$8 sm:$0x3] %vm1690, %v1684
    %1695 = vst.msk [vmem:[%s1693] ss:$8 sm:$0x0] %vm1690, %v1684
    %s1696 = sld [smem:[#allocation12 + $0x80]]
    %v1697 = vstv %s1696
    %v1698 = vmul.f32 %v1697, %v1493
    %v1699 = vmul.f32 %v1697, %v1494
    %s1700 = sld [smem:[#allocation12 + $0x81]]
    %v1701 = vstv %s1700
    %v1702 = vmul.f32 %v1701, %v1527
    %v1703 = vmul.f32 %v1701, %v1528
    %v1706 = vrot.slane %v1702, 5
    %v1707 = vrot.slane %v1706, 4
    %v1708 = vrot.slane %v1703, 5
    %v1709 = vrot.slane %v1708, 4
    %v1712 = vadd.f32 %v1698, %v1707
    %v1713 = vadd.f32 %v1699, %v1709
    %s1714 = sld [smem:[#allocation12 + $0x82]]
    %v1715 = vstv %s1714
    %v1716 = vmul.f32 %v1715, %v1561
    %v1717 = vmul.f32 %v1715, %v1562
    %v1720 = vrot.slane %v1716, 6
    %v1721 = vrot.slane %v1720, 4
    %v1722 = vrot.slane %v1717, 6
    %v1723 = vrot.slane %v1722, 4
    %v1726 = vadd.f32 %v1712, %v1721
    %v1727 = vadd.f32 %v1713, %v1723
    %s1728 = sld [smem:[#allocation12 + $0x83]]
    %v1729 = vstv %s1728
    %v1730 = vmul.f32 %v1729, %v1595
    %v1731 = vmul.f32 %v1729, %v1596
    %v1734 = vrot.slane %v1730, 7
    %v1735 = vrot.slane %v1734, 4
    %v1736 = vrot.slane %v1731, 7
    %v1737 = vrot.slane %v1736, 4
    %v1740 = vadd.f32 %v1726, %v1735
    %v1741 = vadd.f32 %v1727, %v1737
    %v1742 = vxor.u32 %v1740, 2147483648
    %v1743 = vxor.u32 %v1741, 2147483648
    %v1744 = vmul.f32 %v1742, 1.442695
    %v1745 = vpow.pop %v1744
    %v1746 = vmul.f32 %v1743, 1.442695
    %v1747 = vpow.pop %v1746
    %v1748 = vadd.f32 %v1745, 1.0
    %v1749 = vadd.f32 %v1747, 1.0
    %v1750 = vrcp.pop %v1748
    %v1751 = vmul.f32 1.0, %v1750
    %v1752 = vrcp.pop %v1749
    %v1753 = vmul.f32 1.0, %v1752
    %v1757 = vunpack.c.l.s4 1966171168
    %v1758 = vunpack.c.0.s8 %v1757
    %v1759 = vlaneseq
    %v1760 = vshrl.u32 %v1759, 7
    %v1761 = vsub.s32 %v1758, %v1760
    %v1762 = vrot.slane %v1751, %v1761
    %v1764 = vunpack.c.l.s4 1966171168
    %v1765 = vunpack.c.0.s8 %v1764
    %v1766 = vlaneseq
    %v1767 = vshrl.u32 %v1766, 7
    %v1768 = vsub.s32 %v1765, %v1767
    %v1769 = vrot.slane %v1762, %v1768
    %v1771 = vunpack.c.l.s4 1966171168
    %v1772 = vunpack.c.0.s8 %v1771
    %v1773 = vlaneseq
    %v1774 = vshrl.u32 %v1773, 7
    %v1775 = vsub.s32 %v1772, %v1774
    %v1776 = vrot.slane %v1753, %v1775
    %v1778 = vunpack.c.l.s4 1966171168
    %v1779 = vunpack.c.0.s8 %v1778
    %v1780 = vlaneseq
    %v1781 = vshrl.u32 %v1780, 7
    %v1782 = vsub.s32 %v1779, %v1781
    %v1783 = vrot.slane %v1776, %v1782
    %s1786 = scalar_lea.vmem %s8, 1
    %1787 = vst.msk [vmem:[%s1786] ss:$8 sm:$0x3] %vm1690, %v1769
    %1788 = vst.msk [vmem:[%s1786] ss:$8 sm:$0x0] %vm1690, %v1769
    %s1789 = scalar_lea.vmem %s8, 17
    %1790 = vst.msk [vmem:[%s1789] ss:$8 sm:$0x3] %vm1690, %v1783
    %1791 = vst.msk [vmem:[%s1789] ss:$8 sm:$0x0] %vm1690, %v1783
    %s1792 = sld [smem:[#allocation12 + $0x100]]
    %v1793 = vstv %s1792
    %v1794 = vmul.f32 %v1793, %v1493
    %v1795 = vmul.f32 %v1793, %v1494
    %s1796 = sld [smem:[#allocation12 + $0x101]]
    %v1797 = vstv %s1796
    %v1798 = vmul.f32 %v1797, %v1527
    %v1799 = vmul.f32 %v1797, %v1528
    %v1802 = vrot.slane %v1798, 5
    %v1803 = vrot.slane %v1802, 4
    %v1804 = vrot.slane %v1799, 5
    %v1805 = vrot.slane %v1804, 4
    %v1808 = vadd.f32 %v1794, %v1803
    %v1809 = vadd.f32 %v1795, %v1805
    %s1810 = sld [smem:[#allocation12 + $0x102]]
    %v1811 = vstv %s1810
    %v1812 = vmul.f32 %v1811, %v1561
    %v1813 = vmul.f32 %v1811, %v1562
    %v1816 = vrot.slane %v1812, 6
    %v1817 = vrot.slane %v1816, 4
    %v1818 = vrot.slane %v1813, 6
    %v1819 = vrot.slane %v1818, 4
    %v1822 = vadd.f32 %v1808, %v1817
    %v1823 = vadd.f32 %v1809, %v1819
    %s1824 = sld [smem:[#allocation12 + $0x103]]
    %v1825 = vstv %s1824
    %v1826 = vmul.f32 %v1825, %v1595
    %v1827 = vmul.f32 %v1825, %v1596
    %v1830 = vrot.slane %v1826, 7
    %v1831 = vrot.slane %v1830, 4
    %v1832 = vrot.slane %v1827, 7
    %v1833 = vrot.slane %v1832, 4
    %v1836 = vadd.f32 %v1822, %v1831
    %v1837 = vadd.f32 %v1823, %v1833
    %v1838 = vxor.u32 %v1836, 2147483648
    %v1839 = vxor.u32 %v1837, 2147483648
    %v1840 = vmul.f32 %v1838, 1.442695
    %v1841 = vpow.pop %v1840
    %v1842 = vmul.f32 %v1839, 1.442695
    %v1843 = vpow.pop %v1842
    %v1844 = vadd.f32 %v1841, 1.0
    %v1845 = vadd.f32 %v1843, 1.0
    %v1846 = vrcp.pop %v1844
    %v1847 = vmul.f32 1.0, %v1846
    %v1848 = vrcp.pop %v1845
    %v1849 = vmul.f32 1.0, %v1848
    %v1853 = vunpack.c.l.s4 1966171168
    %v1854 = vunpack.c.0.s8 %v1853
    %v1855 = vlaneseq
    %v1856 = vshrl.u32 %v1855, 7
    %v1857 = vsub.s32 %v1854, %v1856
    %v1858 = vrot.slane %v1847, %v1857
    %v1860 = vunpack.c.l.s4 1966171168
    %v1861 = vunpack.c.0.s8 %v1860
    %v1862 = vlaneseq
    %v1863 = vshrl.u32 %v1862, 7
    %v1864 = vsub.s32 %v1861, %v1863
    %v1865 = vrot.slane %v1858, %v1864
    %v1867 = vunpack.c.l.s4 1966171168
    %v1868 = vunpack.c.0.s8 %v1867
    %v1869 = vlaneseq
    %v1870 = vshrl.u32 %v1869, 7
    %v1871 = vsub.s32 %v1868, %v1870
    %v1872 = vrot.slane %v1849, %v1871
    %v1874 = vunpack.c.l.s4 1966171168
    %v1875 = vunpack.c.0.s8 %v1874
    %v1876 = vlaneseq
    %v1877 = vshrl.u32 %v1876, 7
    %v1878 = vsub.s32 %v1875, %v1877
    %v1879 = vrot.slane %v1872, %v1878
    %s1882 = scalar_lea.vmem %s8, 2
    %1883 = vst.msk [vmem:[%s1882] ss:$8 sm:$0x3] %vm1690, %v1865
    %1884 = vst.msk [vmem:[%s1882] ss:$8 sm:$0x0] %vm1690, %v1865
    %s1885 = scalar_lea.vmem %s8, 18
    %1886 = vst.msk [vmem:[%s1885] ss:$8 sm:$0x3] %vm1690, %v1879
    %1887 = vst.msk [vmem:[%s1885] ss:$8 sm:$0x0] %vm1690, %v1879
    %s1888 = sld [smem:[#allocation12 + $0x180]]
    %v1889 = vstv %s1888
    %v1890 = vmul.f32 %v1889, %v1493
    %v1891 = vmul.f32 %v1889, %v1494
    %s1892 = sld [smem:[#allocation12 + $0x181]]
    %v1893 = vstv %s1892
    %v1894 = vmul.f32 %v1893, %v1527
    %v1895 = vmul.f32 %v1893, %v1528
    %v1898 = vrot.slane %v1894, 5
    %v1899 = vrot.slane %v1898, 4
    %v1900 = vrot.slane %v1895, 5
    %v1901 = vrot.slane %v1900, 4
    %v1904 = vadd.f32 %v1890, %v1899
    %v1905 = vadd.f32 %v1891, %v1901
    %s1906 = sld [smem:[#allocation12 + $0x182]]
    %v1907 = vstv %s1906
    %v1908 = vmul.f32 %v1907, %v1561
    %v1909 = vmul.f32 %v1907, %v1562
    %v1912 = vrot.slane %v1908, 6
    %v1913 = vrot.slane %v1912, 4
    %v1914 = vrot.slane %v1909, 6
    %v1915 = vrot.slane %v1914, 4
    %v1918 = vadd.f32 %v1904, %v1913
    %v1919 = vadd.f32 %v1905, %v1915
    %s1920 = sld [smem:[#allocation12 + $0x183]]
    %v1921 = vstv %s1920
    %v1922 = vmul.f32 %v1921, %v1595
    %v1923 = vmul.f32 %v1921, %v1596
    %v1926 = vrot.slane %v1922, 7
    %v1927 = vrot.slane %v1926, 4
    %v1928 = vrot.slane %v1923, 7
    %v1929 = vrot.slane %v1928, 4
    %v1932 = vadd.f32 %v1918, %v1927
    %v1933 = vadd.f32 %v1919, %v1929
    %v1934 = vxor.u32 %v1932, 2147483648
    %v1935 = vxor.u32 %v1933, 2147483648
    %v1936 = vmul.f32 %v1934, 1.442695
    %v1937 = vpow.pop %v1936
    %v1938 = vmul.f32 %v1935, 1.442695
    %v1939 = vpow.pop %v1938
    %v1940 = vadd.f32 %v1937, 1.0
    %v1941 = vadd.f32 %v1939, 1.0
    %v1942 = vrcp.pop %v1940
    %v1943 = vmul.f32 1.0, %v1942
    %v1944 = vrcp.pop %v1941
    %v1945 = vmul.f32 1.0, %v1944
    %v1949 = vunpack.c.l.s4 1966171168
    %v1950 = vunpack.c.0.s8 %v1949
    %v1951 = vlaneseq
    %v1952 = vshrl.u32 %v1951, 7
    %v1953 = vsub.s32 %v1950, %v1952
    %v1954 = vrot.slane %v1943, %v1953
    %v1956 = vunpack.c.l.s4 1966171168
    %v1957 = vunpack.c.0.s8 %v1956
    %v1958 = vlaneseq
    %v1959 = vshrl.u32 %v1958, 7
    %v1960 = vsub.s32 %v1957, %v1959
    %v1961 = vrot.slane %v1954, %v1960
    %v1963 = vunpack.c.l.s4 1966171168
    %v1964 = vunpack.c.0.s8 %v1963
    %v1965 = vlaneseq
    %v1966 = vshrl.u32 %v1965, 7
    %v1967 = vsub.s32 %v1964, %v1966
    %v1968 = vrot.slane %v1945, %v1967
    %v1970 = vunpack.c.l.s4 1966171168
    %v1971 = vunpack.c.0.s8 %v1970
    %v1972 = vlaneseq
    %v1973 = vshrl.u32 %v1972, 7
    %v1974 = vsub.s32 %v1971, %v1973
    %v1975 = vrot.slane %v1968, %v1974
    %s1978 = scalar_lea.vmem %s8, 3
    %1979 = vst.msk [vmem:[%s1978] ss:$8 sm:$0x3] %vm1690, %v1961
    %1980 = vst.msk [vmem:[%s1978] ss:$8 sm:$0x0] %vm1690, %v1961
    %s1981 = scalar_lea.vmem %s8, 19
    %1982 = vst.msk [vmem:[%s1981] ss:$8 sm:$0x3] %vm1690, %v1975
    %1983 = vst.msk [vmem:[%s1981] ss:$8 sm:$0x0] %vm1690, %v1975
    %s1984 = sld [smem:[#allocation12 + $0x200]]
    %v1985 = vstv %s1984
    %v1986 = vmul.f32 %v1985, %v1493
    %v1987 = vmul.f32 %v1985, %v1494
    %s1988 = sld [smem:[#allocation12 + $0x201]]
    %v1989 = vstv %s1988
    %v1990 = vmul.f32 %v1989, %v1527
    %v1991 = vmul.f32 %v1989, %v1528
    %v1994 = vrot.slane %v1990, 5
    %v1995 = vrot.slane %v1994, 4
    %v1996 = vrot.slane %v1991, 5
    %v1997 = vrot.slane %v1996, 4
    %v2000 = vadd.f32 %v1986, %v1995
    %v2001 = vadd.f32 %v1987, %v1997
    %s2002 = sld [smem:[#allocation12 + $0x202]]
    %v2003 = vstv %s2002
    %v2004 = vmul.f32 %v2003, %v1561
    %v2005 = vmul.f32 %v2003, %v1562
    %v2008 = vrot.slane %v2004, 6
    %v2009 = vrot.slane %v2008, 4
    %v2010 = vrot.slane %v2005, 6
    %v2011 = vrot.slane %v2010, 4
    %v2014 = vadd.f32 %v2000, %v2009
    %v2015 = vadd.f32 %v2001, %v2011
    %s2016 = sld [smem:[#allocation12 + $0x203]]
    %v2017 = vstv %s2016
    %v2018 = vmul.f32 %v2017, %v1595
    %v2019 = vmul.f32 %v2017, %v1596
    %v2022 = vrot.slane %v2018, 7
    %v2023 = vrot.slane %v2022, 4
    %v2024 = vrot.slane %v2019, 7
    %v2025 = vrot.slane %v2024, 4
    %v2028 = vadd.f32 %v2014, %v2023
    %v2029 = vadd.f32 %v2015, %v2025
    %v2030 = vxor.u32 %v2028, 2147483648
    %v2031 = vxor.u32 %v2029, 2147483648
    %v2032 = vmul.f32 %v2030, 1.442695
    %v2033 = vpow.pop %v2032
    %v2034 = vmul.f32 %v2031, 1.442695
    %v2035 = vpow.pop %v2034
    %v2036 = vadd.f32 %v2033, 1.0
    %v2037 = vadd.f32 %v2035, 1.0
    %v2038 = vrcp.pop %v2036
    %v2039 = vmul.f32 1.0, %v2038
    %v2040 = vrcp.pop %v2037
    %v2041 = vmul.f32 1.0, %v2040
    %v2045 = vunpack.c.l.s4 1966171168
    %v2046 = vunpack.c.0.s8 %v2045
    %v2047 = vlaneseq
    %v2048 = vshrl.u32 %v2047, 7
    %v2049 = vsub.s32 %v2046, %v2048
    %v2050 = vrot.slane %v2039, %v2049
    %v2052 = vunpack.c.l.s4 1966171168
    %v2053 = vunpack.c.0.s8 %v2052
    %v2054 = vlaneseq
    %v2055 = vshrl.u32 %v2054, 7
    %v2056 = vsub.s32 %v2053, %v2055
    %v2057 = vrot.slane %v2050, %v2056
    %v2059 = vunpack.c.l.s4 1966171168
    %v2060 = vunpack.c.0.s8 %v2059
    %v2061 = vlaneseq
    %v2062 = vshrl.u32 %v2061, 7
    %v2063 = vsub.s32 %v2060, %v2062
    %v2064 = vrot.slane %v2041, %v2063
    %v2066 = vunpack.c.l.s4 1966171168
    %v2067 = vunpack.c.0.s8 %v2066
    %v2068 = vlaneseq
    %v2069 = vshrl.u32 %v2068, 7
    %v2070 = vsub.s32 %v2067, %v2069
    %v2071 = vrot.slane %v2064, %v2070
    %s2074 = scalar_lea.vmem %s8, 4
    %2075 = vst.msk [vmem:[%s2074] ss:$8 sm:$0x3] %vm1690, %v2057
    %2076 = vst.msk [vmem:[%s2074] ss:$8 sm:$0x0] %vm1690, %v2057
    %s2077 = scalar_lea.vmem %s8, 20
    %2078 = vst.msk [vmem:[%s2077] ss:$8 sm:$0x3] %vm1690, %v2071
    %2079 = vst.msk [vmem:[%s2077] ss:$8 sm:$0x0] %vm1690, %v2071
    %s2080 = sld [smem:[#allocation12 + $0x280]]
    %v2081 = vstv %s2080
    %v2082 = vmul.f32 %v2081, %v1493
    %v2083 = vmul.f32 %v2081, %v1494
    %s2084 = sld [smem:[#allocation12 + $0x281]]
    %v2085 = vstv %s2084
    %v2086 = vmul.f32 %v2085, %v1527
    %v2087 = vmul.f32 %v2085, %v1528
    %v2090 = vrot.slane %v2086, 5
    %v2091 = vrot.slane %v2090, 4
    %v2092 = vrot.slane %v2087, 5
    %v2093 = vrot.slane %v2092, 4
    %v2096 = vadd.f32 %v2082, %v2091
    %v2097 = vadd.f32 %v2083, %v2093
    %s2098 = sld [smem:[#allocation12 + $0x282]]
    %v2099 = vstv %s2098
    %v2100 = vmul.f32 %v2099, %v1561
    %v2101 = vmul.f32 %v2099, %v1562
    %v2104 = vrot.slane %v2100, 6
    %v2105 = vrot.slane %v2104, 4
    %v2106 = vrot.slane %v2101, 6
    %v2107 = vrot.slane %v2106, 4
    %v2110 = vadd.f32 %v2096, %v2105
    %v2111 = vadd.f32 %v2097, %v2107
    %s2112 = sld [smem:[#allocation12 + $0x283]]
    %v2113 = vstv %s2112
    %v2114 = vmul.f32 %v2113, %v1595
    %v2115 = vmul.f32 %v2113, %v1596
    %v2118 = vrot.slane %v2114, 7
    %v2119 = vrot.slane %v2118, 4
    %v2120 = vrot.slane %v2115, 7
    %v2121 = vrot.slane %v2120, 4
    %v2124 = vadd.f32 %v2110, %v2119
    %v2125 = vadd.f32 %v2111, %v2121
    %v2126 = vxor.u32 %v2124, 2147483648
    %v2127 = vxor.u32 %v2125, 2147483648
    %v2128 = vmul.f32 %v2126, 1.442695
    %v2129 = vpow.pop %v2128
    %v2130 = vmul.f32 %v2127, 1.442695
    %v2131 = vpow.pop %v2130
    %v2132 = vadd.f32 %v2129, 1.0
    %v2133 = vadd.f32 %v2131, 1.0
    %v2134 = vrcp.pop %v2132
    %v2135 = vmul.f32 1.0, %v2134
    %v2136 = vrcp.pop %v2133
    %v2137 = vmul.f32 1.0, %v2136
    %v2141 = vunpack.c.l.s4 1966171168
    %v2142 = vunpack.c.0.s8 %v2141
    %v2143 = vlaneseq
    %v2144 = vshrl.u32 %v2143, 7
    %v2145 = vsub.s32 %v2142, %v2144
    %v2146 = vrot.slane %v2135, %v2145
    %v2148 = vunpack.c.l.s4 1966171168
    %v2149 = vunpack.c.0.s8 %v2148
    %v2150 = vlaneseq
    %v2151 = vshrl.u32 %v2150, 7
    %v2152 = vsub.s32 %v2149, %v2151
    %v2153 = vrot.slane %v2146, %v2152
    %v2155 = vunpack.c.l.s4 1966171168
    %v2156 = vunpack.c.0.s8 %v2155
    %v2157 = vlaneseq
    %v2158 = vshrl.u32 %v2157, 7
    %v2159 = vsub.s32 %v2156, %v2158
    %v2160 = vrot.slane %v2137, %v2159
    %v2162 = vunpack.c.l.s4 1966171168
    %v2163 = vunpack.c.0.s8 %v2162
    %v2164 = vlaneseq
    %v2165 = vshrl.u32 %v2164, 7
    %v2166 = vsub.s32 %v2163, %v2165
    %v2167 = vrot.slane %v2160, %v2166
    %s2170 = scalar_lea.vmem %s8, 5
    %2171 = vst.msk [vmem:[%s2170] ss:$8 sm:$0x3] %vm1690, %v2153
    %2172 = vst.msk [vmem:[%s2170] ss:$8 sm:$0x0] %vm1690, %v2153
    %s2173 = scalar_lea.vmem %s8, 21
    %2174 = vst.msk [vmem:[%s2173] ss:$8 sm:$0x3] %vm1690, %v2167
    %2175 = vst.msk [vmem:[%s2173] ss:$8 sm:$0x0] %vm1690, %v2167
    // Predicated region
    $region58: #{tpu_custom_call.1} parent=1 // pred_check
      _
    $region59: #{tpu_custom_call.1} parent=1 // pred_check_branch
      %2177 = sbr.rel (0) target = $region61
    $region60: #{tpu_custom_call.1} parent=1 // pred_region
      _
    $region61: #{tpu_custom_call.1} parent=1 // pred_fallthru
      _
    // Predicated region
    $region62: #{tpu_custom_call.1} parent=1 // pred_check
      _
    $region63: #{tpu_custom_call.1} parent=1 // pred_check_branch
      %2179 = sbr.rel (0) target = $region65
    $region64: #{tpu_custom_call.1} parent=1 // pred_region
      _
    $region65: #{tpu_custom_call.1} parent=1 // pred_fallthru
      _
    %2180 = vsyncpa [#allocation4], 1
    %2181 = vsyncpa [#allocation7], 1
    %2182 = vsyncpa [#allocation5], 1
    %2183 = vsyncpa [#allocation10], 1
    %2184 = vsyncpa [#allocation13], 1

</llo_original>
